<compile_context>
chip_gen: v7x
topology: tpu7x:2x2x1
jax: 0.10.0
libtpu: 0.0.40
codegen_flags: <defaults>
</compile_context>

<pallas_src>
import functools
import math

import jax
import jax.numpy as jnp
from jax.experimental import pallas as pl
from jax.experimental.pallas import tpu as pltpu


# ----------------------------- math helpers ------------------------------- #

def _layernorm(x, gamma, beta, eps):
    mean = jnp.mean(x, axis=-1, keepdims=True)
    xc = x - mean
    var = jnp.mean(xc * xc, axis=-1, keepdims=True)
    inv = jax.lax.rsqrt(var + eps)
    return xc * inv * gamma + beta


def _gelu(x):
    # tanh-approximate GELU (EUP tanh; see TODO above).
    c = math.sqrt(2.0 / math.pi)
    return 0.5 * x * (1.0 + jnp.tanh(c * (x + 0.044715 * x * x * x)))


# ------------------------------- kernel ------------------------------------ #

def bert_layer_kernel(x_ref, mask_ref,
                      wq_ref, bq_ref, wk_ref, bk_ref, wv_ref, bv_ref,
                      wo_ref, bo_ref, g1_ref, b1_ref,
                      wi_ref, bi_ref, wo2_ref, bo2_ref, g2_ref, b2_ref,
                      out_ref, *, num_heads, head_dim, eps):
    x = x_ref[0]            # (S, H) f32 — one batch element's token slab
    mask = mask_ref[0]      # (1, S) additive attention mask (0 / -1e4)

    # QKV projections (weights already transposed to (in, out) by the wrapper).
    q = jnp.dot(x, wq_ref[...], preferred_element_type=jnp.float32) + bq_ref[...]
    k = jnp.dot(x, wk_ref[...], preferred_element_type=jnp.float32) + bk_ref[...]
    v = jnp.dot(x, wv_ref[...], preferred_element_type=jnp.float32) + bv_ref[...]

    S, H = x.shape
    scale = 1.0 / math.sqrt(head_dim)

    # Per-head attention, folding the output projection per head:
    #   ctx @ Wo == sum_h ctx_h @ Wo[h*hd:(h+1)*hd, :]
    # (avoids an in-kernel concatenate / reshape of the head dimension).
    attn = jnp.zeros((S, H), jnp.float32)
    for h in range(num_heads):
        lo, hi = h * head_dim, (h + 1) * head_dim
        qh = q[:, lo:hi]                                   # (S, hd)
        kh = k[:, lo:hi]
        vh = v[:, lo:hi]
        # scores = q @ k^T  (contract the head dim of both operands)
        s = jax.lax.dot_general(qh, kh, (((1,), (1,)), ((), ())),
                                preferred_element_type=jnp.float32) * scale
        s = s + mask                                       # broadcast over query rows
        # softmax over keys (f32 throughout)
        m = jnp.max(s, axis=-1, keepdims=True)
        e = jnp.exp(s - m)
        p = e / jnp.sum(e, axis=-1, keepdims=True)
        ctx_h = jnp.dot(p, vh, preferred_element_type=jnp.float32)        # (S, hd)
        attn = attn + jnp.dot(ctx_h, wo_ref[lo:hi, :],
                              preferred_element_type=jnp.float32)
    attn = attn + bo_ref[...]

    # BertSelfOutput: dense (done above) + residual + LayerNorm
    h1 = _layernorm(attn + x, g1_ref[...], b1_ref[...], eps)

    # BertIntermediate: dense + GELU
    inter = _gelu(jnp.dot(h1, wi_ref[...],
                          preferred_element_type=jnp.float32) + bi_ref[...])

    # BertOutput: dense + residual + LayerNorm
    ffn = jnp.dot(inter, wo2_ref[...],
                  preferred_element_type=jnp.float32) + bo2_ref[...]
    out_ref[0] = _layernorm(ffn + h1, g2_ref[...], b2_ref[...], eps)


# ------------------------------- wrapper ------------------------------------ #

def bert_layer(hidden_states, attention_mask, params, *, num_heads, eps=1e-12):
    """hidden_states: (B, S, H) f32;  attention_mask: (B, 1, 1, S) additive."""
    B, S, H = hidden_states.shape
    I = params["wi"].shape[0]
    assert H % num_heads == 0
    head_dim = H // num_heads

    # PyTorch Linear stores W as (out, in); pre-transpose so the kernel does x @ W.
    wq, wk, wv, wo = params["wq"].T, params["wk"].T, params["wv"].T, params["wo"].T
    wi, wo2 = params["wi"].T, params["wo2"].T
    bq = params["bq"].reshape(1, H); bk = params["bk"].reshape(1, H)
    bv = params["bv"].reshape(1, H); bo = params["bo"].reshape(1, H)
    bi = params["bi"].reshape(1, I); bo2 = params["bo2"].reshape(1, H)
    g1 = params["g1"].reshape(1, H); b1 = params["b1"].reshape(1, H)
    g2 = params["g2"].reshape(1, H); b2 = params["b2"].reshape(1, H)

    mask = attention_mask.reshape(B, 1, S).astype(jnp.float32)

    def batch_spec(shape):
        # Per-batch slab: last two block dims equal the full array extents.
        return pl.BlockSpec(shape, lambda b: (b,) + (0,) * (len(shape) - 1))

    def resident_spec(arr):
        # Full-extent block, same index every grid step => stays in VMEM.
        nd = arr.ndim
        return pl.BlockSpec(arr.shape, lambda b, _nd=nd: (0,) * _nd)

    weights = [wq, bq, wk, bk, wv, bv, wo, bo, g1, b1,
               wi, bi, wo2, bo2, g2, b2]
    in_specs = ([batch_spec((1, S, H)), batch_spec((1, 1, S))]
                + [resident_spec(w) for w in weights])

    kernel = functools.partial(bert_layer_kernel, num_heads=num_heads,
                               head_dim=head_dim, eps=eps)

    return pl.pallas_call(
        kernel,
        out_shape=jax.ShapeDtypeStruct((B, S, H), jnp.float32),
        grid_spec=pltpu.PrefetchScalarGridSpec(
            num_scalar_prefetch=0,
            grid=(B,),
            in_specs=in_specs,
            out_specs=batch_spec((1, S, H)),
        ),
        # Batch axis is independent -> "parallel" (uses both TCs on v7x).
        compiler_params=pltpu.CompilerParams(
            dimension_semantics=("parallel",)),
    )(hidden_states.astype(jnp.float32), mask, *weights)


# ------------------------------ reference ----------------------------------- #

def reference_bert_layer(hidden_states, attention_mask, params, *, num_heads,
                         eps=1e-12):
    """Pure-JAX reference mirroring the PyTorch BertLayer forward (eval mode)."""
    x = hidden_states.astype(jnp.float32)
    B, S, H = x.shape
    hd = H // num_heads

    def lin(t, w, b):
        return jnp.einsum("bsh,oh->bso", t, w) + b

    def heads(t):
        return t.reshape(B, S, num_heads, hd).transpose(0, 2, 1, 3)

    q = heads(lin(x, params["wq"], params["bq"]))
    k = heads(lin(x, params["wk"], params["bk"]))
    v = heads(lin(x, params["wv"], params["bv"]))

    scores = jnp.einsum("bhqd,bhkd->bhqk", q, k) / math.sqrt(hd)
    scores = scores + attention_mask                    # (B,1,1,S) broadcast
    probs = jax.nn.softmax(scores, axis=-1)
    ctx = jnp.einsum("bhqk,bhkd->bhqd", probs, v)
    ctx = ctx.transpose(0, 2, 1, 3).reshape(B, S, H)

    attn = lin(ctx, params["wo"], params["bo"])
    h1 = _layernorm(attn + x, params["g1"], params["b1"], eps)
    inter = _gelu(lin(h1, params["wi"], params["bi"]))
    ffn = lin(inter, params["wo2"], params["bo2"])
    return _layernorm(ffn + h1, params["g2"], params["b2"], eps)


# -------------------------------- demo -------------------------------------- #

if __name__ == "__main__":
    B, S, H = 2, 8, 32
    num_heads = 4
    intermediate = 64
    eps = 1e-12

    key = jax.random.PRNGKey(0)
    ks = jax.random.split(key, 18)

    def w(k, shape, scale=0.02):
        return scale * jax.random.normal(k, shape, jnp.float32)

    params = {
        "wq": w(ks[0], (H, H)),             "bq": w(ks[1], (H,)),
        "wk": w(ks[2], (H, H)),             "bk": w(ks[3], (H,)),
        "wv": w(ks[4], (H, H)),             "bv": w(ks[5], (H,)),
        "wo": w(ks[6], (H, H)),             "bo": w(ks[7], (H,)),
        "g1": 1.0 + 0.1 * jax.random.normal(ks[8], (H,), jnp.float32),
        "b1": 0.1 * jax.random.normal(ks[9], (H,), jnp.float32),
        "wi": w(ks[10], (intermediate, H)), "bi": w(ks[11], (intermediate,)),
        "wo2": w(ks[12], (H, intermediate)), "bo2": w(ks[13], (H,)),
        "g2": 1.0 + 0.1 * jax.random.normal(ks[14], (H,), jnp.float32),
        "b2": 0.1 * jax.random.normal(ks[15], (H,), jnp.float32),
    }

    hidden_states = jax.random.normal(ks[16], (B, S, H), jnp.float32)

    # Standard HF-style additive extended mask (B, 1, 1, S):
    # batch 1 masks out its last 2 key positions.
    keep = jnp.ones((B, S), jnp.float32).at[1, -2:].set(0.0)
    attention_mask = (1.0 - keep)[:, None, None, :] * -10000.0

    out = bert_layer(hidden_states, attention_mask, params,
                     num_heads=num_heads, eps=eps)
    out = jax.block_until_ready(out)

    ref = reference_bert_layer(hidden_states, attention_mask, params,
                               num_heads=num_heads, eps=eps)
    assert out.shape == (B, S, H)
    err = float(jnp.max(jnp.abs(out - ref)))
    assert err < 1e-4, f"max abs err {err}"

    print("KERNEL_OK")
</pallas_src>

<mosaic_0001>
module attributes {stable_mosaic.version = 11 : i64} {
  func.func @bert_layer_kernel(%arg0: i32, %arg1: memref<1x8x32xf32, #tpu.memory_space<vmem>>, %arg2: memref<1x1x8xf32, #tpu.memory_space<vmem>>, %arg3: memref<32x32xf32, #tpu.memory_space<vmem>>, %arg4: memref<1x32xf32, #tpu.memory_space<vmem>>, %arg5: memref<32x32xf32, #tpu.memory_space<vmem>>, %arg6: memref<1x32xf32, #tpu.memory_space<vmem>>, %arg7: memref<32x32xf32, #tpu.memory_space<vmem>>, %arg8: memref<1x32xf32, #tpu.memory_space<vmem>>, %arg9: memref<32x32xf32, #tpu.memory_space<vmem>>, %arg10: memref<1x32xf32, #tpu.memory_space<vmem>>, %arg11: memref<1x32xf32, #tpu.memory_space<vmem>>, %arg12: memref<1x32xf32, #tpu.memory_space<vmem>>, %arg13: memref<32x64xf32, #tpu.memory_space<vmem>>, %arg14: memref<1x64xf32, #tpu.memory_space<vmem>>, %arg15: memref<64x32xf32, #tpu.memory_space<vmem>>, %arg16: memref<1x32xf32, #tpu.memory_space<vmem>>, %arg17: memref<1x32xf32, #tpu.memory_space<vmem>>, %arg18: memref<1x32xf32, #tpu.memory_space<vmem>>, %arg19: memref<1x8x32xf32, #tpu.memory_space<vmem>>) attributes {dimension_semantics = [#tpu.dimension_semantics<parallel>], iteration_bounds = array<i64: 2>, scalar_prefetch = 0 : i64, scratch_operands = 0 : i64, tpu.core_type = #tpu.core_type<tc>, window_params = [{transform_indices = @transform_0, window_bounds = array<i64: 1, 8, 32>}, {transform_indices = @transform_1, window_bounds = array<i64: 1, 1, 8>}, {pipeline_mode = #tpu.pipeline_mode<synchronous>, transform_indices = @transform_2, window_bounds = array<i64: 32, 32>}, {pipeline_mode = #tpu.pipeline_mode<synchronous>, transform_indices = @transform_3, window_bounds = array<i64: 1, 32>}, {pipeline_mode = #tpu.pipeline_mode<synchronous>, transform_indices = @transform_4, window_bounds = array<i64: 32, 32>}, {pipeline_mode = #tpu.pipeline_mode<synchronous>, transform_indices = @transform_5, window_bounds = array<i64: 1, 32>}, {pipeline_mode = #tpu.pipeline_mode<synchronous>, transform_indices = @transform_6, window_bounds = array<i64: 32, 32>}, {pipeline_mode = #tpu.pipeline_mode<synchronous>, transform_indices = @transform_7, window_bounds = array<i64: 1, 32>}, {pipeline_mode = #tpu.pipeline_mode<synchronous>, transform_indices = @transform_8, window_bounds = array<i64: 32, 32>}, {pipeline_mode = #tpu.pipeline_mode<synchronous>, transform_indices = @transform_9, window_bounds = array<i64: 1, 32>}, {pipeline_mode = #tpu.pipeline_mode<synchronous>, transform_indices = @transform_10, window_bounds = array<i64: 1, 32>}, {pipeline_mode = #tpu.pipeline_mode<synchronous>, transform_indices = @transform_11, window_bounds = array<i64: 1, 32>}, {pipeline_mode = #tpu.pipeline_mode<synchronous>, transform_indices = @transform_12, window_bounds = array<i64: 32, 64>}, {pipeline_mode = #tpu.pipeline_mode<synchronous>, transform_indices = @transform_13, window_bounds = array<i64: 1, 64>}, {pipeline_mode = #tpu.pipeline_mode<synchronous>, transform_indices = @transform_14, window_bounds = array<i64: 64, 32>}, {pipeline_mode = #tpu.pipeline_mode<synchronous>, transform_indices = @transform_15, window_bounds = array<i64: 1, 32>}, {pipeline_mode = #tpu.pipeline_mode<synchronous>, transform_indices = @transform_16, window_bounds = array<i64: 1, 32>}, {pipeline_mode = #tpu.pipeline_mode<synchronous>, transform_indices = @transform_17, window_bounds = array<i64: 1, 32>}, {transform_indices = @transform_18, window_bounds = array<i64: 1, 8, 32>}]} {
    %c0 = arith.constant 0 : index
    %c0_0 = arith.constant 0 : index
    %c0_1 = arith.constant 0 : index
    %0 = vector.load %arg1[%c0, %c0_0, %c0_1] : memref<1x8x32xf32, #tpu.memory_space<vmem>>, vector<1x8x32xf32>
    %1 = vector.shape_cast %0 : vector<1x8x32xf32> to vector<8x32xf32>
    %c0_2 = arith.constant 0 : index
    %c0_3 = arith.constant 0 : index
    %c0_4 = arith.constant 0 : index
    %2 = vector.load %arg2[%c0_2, %c0_3, %c0_4] : memref<1x1x8xf32, #tpu.memory_space<vmem>>, vector<1x1x8xf32>
    %3 = vector.shape_cast %2 : vector<1x1x8xf32> to vector<1x8xf32>
    %c0_5 = arith.constant 0 : index
    %c0_6 = arith.constant 0 : index
    %4 = vector.load %arg3[%c0_5, %c0_6] : memref<32x32xf32, #tpu.memory_space<vmem>>, vector<32x32xf32>
    %cst = arith.constant dense<0.000000e+00> : vector<8x32xf32>
    %5 = tpu.matmul %1, %4, %cst {dimension_numbers = #tpu.dot_dimension_numbers<[1], [0], [0], [1], [0, 0, 1, 1], [], []>} : vector<8x32xf32>, vector<32x32xf32>, vector<8x32xf32> -> vector<8x32xf32>
    %c0_7 = arith.constant 0 : index
    %c0_8 = arith.constant 0 : index
    %6 = vector.load %arg4[%c0_7, %c0_8] : memref<1x32xf32, #tpu.memory_space<vmem>>, vector<1x32xf32>
    %7 = vector.broadcast %6 : vector<1x32xf32> to vector<8x32xf32>
    %8 = arith.addf %5, %7 : vector<8x32xf32>
    %c0_9 = arith.constant 0 : index
    %c0_10 = arith.constant 0 : index
    %9 = vector.load %arg5[%c0_9, %c0_10] : memref<32x32xf32, #tpu.memory_space<vmem>>, vector<32x32xf32>
    %cst_11 = arith.constant dense<0.000000e+00> : vector<8x32xf32>
    %10 = tpu.matmul %1, %9, %cst_11 {dimension_numbers = #tpu.dot_dimension_numbers<[1], [0], [0], [1], [0, 0, 1, 1], [], []>} : vector<8x32xf32>, vector<32x32xf32>, vector<8x32xf32> -> vector<8x32xf32>
    %c0_12 = arith.constant 0 : index
    %c0_13 = arith.constant 0 : index
    %11 = vector.load %arg6[%c0_12, %c0_13] : memref<1x32xf32, #tpu.memory_space<vmem>>, vector<1x32xf32>
    %12 = vector.broadcast %11 : vector<1x32xf32> to vector<8x32xf32>
    %13 = arith.addf %10, %12 : vector<8x32xf32>
    %c0_14 = arith.constant 0 : index
    %c0_15 = arith.constant 0 : index
    %14 = vector.load %arg7[%c0_14, %c0_15] : memref<32x32xf32, #tpu.memory_space<vmem>>, vector<32x32xf32>
    %cst_16 = arith.constant dense<0.000000e+00> : vector<8x32xf32>
    %15 = tpu.matmul %1, %14, %cst_16 {dimension_numbers = #tpu.dot_dimension_numbers<[1], [0], [0], [1], [0, 0, 1, 1], [], []>} : vector<8x32xf32>, vector<32x32xf32>, vector<8x32xf32> -> vector<8x32xf32>
    %c0_17 = arith.constant 0 : index
    %c0_18 = arith.constant 0 : index
    %16 = vector.load %arg8[%c0_17, %c0_18] : memref<1x32xf32, #tpu.memory_space<vmem>>, vector<1x32xf32>
    %17 = vector.broadcast %16 : vector<1x32xf32> to vector<8x32xf32>
    %18 = arith.addf %15, %17 : vector<8x32xf32>
    %cst_19 = arith.constant 0.000000e+00 : f32
    %19 = vector.broadcast %cst_19 : f32 to vector<8x32xf32>
    %20 = vector.extract_strided_slice %8 {offsets = [0, 0], sizes = [8, 8], strides = [1, 1]} : vector<8x32xf32> to vector<8x8xf32>
    %21 = vector.extract_strided_slice %13 {offsets = [0, 0], sizes = [8, 8], strides = [1, 1]} : vector<8x32xf32> to vector<8x8xf32>
    %22 = vector.extract_strided_slice %18 {offsets = [0, 0], sizes = [8, 8], strides = [1, 1]} : vector<8x32xf32> to vector<8x8xf32>
    %cst_20 = arith.constant dense<0.000000e+00> : vector<8x8xf32>
    %23 = tpu.matmul %20, %21, %cst_20 {dimension_numbers = #tpu.dot_dimension_numbers<[1], [1], [0], [0], [0, 0, 1, 0], [], []>} : vector<8x8xf32>, vector<8x8xf32>, vector<8x8xf32> -> vector<8x8xf32>
    %cst_21 = arith.constant 0.353553385 : f32
    %24 = vector.broadcast %cst_21 : f32 to vector<8x8xf32>
    %25 = arith.mulf %23, %24 : vector<8x8xf32>
    %26 = vector.broadcast %3 : vector<1x8xf32> to vector<8x8xf32>
    %27 = arith.addf %25, %26 : vector<8x8xf32>
    %cst_22 = arith.constant dense<0xFF800000> : vector<8xf32>
    %28 = vector.multi_reduction <maximumf>, %27, %cst_22 [1] : vector<8x8xf32> to vector<8xf32>
    %29 = vector.shape_cast %28 : vector<8xf32> to vector<8x1xf32>
    %30 = vector.broadcast %29 : vector<8x1xf32> to vector<8x8xf32>
    %31 = arith.subf %27, %30 : vector<8x8xf32>
    %32 = math.exp %31 : vector<8x8xf32>
    %cst_23 = arith.constant dense<0.000000e+00> : vector<8xf32>
    %33 = vector.multi_reduction <add>, %32, %cst_23 [1] : vector<8x8xf32> to vector<8xf32>
    %34 = vector.shape_cast %33 : vector<8xf32> to vector<8x1xf32>
    %35 = vector.broadcast %34 : vector<8x1xf32> to vector<8x8xf32>
    %36 = arith.divf %32, %35 : vector<8x8xf32>
    %cst_24 = arith.constant dense<0.000000e+00> : vector<8x8xf32>
    %37 = tpu.matmul %36, %22, %cst_24 {dimension_numbers = #tpu.dot_dimension_numbers<[1], [0], [0], [1], [0, 0, 1, 1], [], []>} : vector<8x8xf32>, vector<8x8xf32>, vector<8x8xf32> -> vector<8x8xf32>
    %c0_25 = arith.constant 0 : index
    %c0_26 = arith.constant 0 : index
    %38 = vector.load %arg9[%c0_25, %c0_26] : memref<32x32xf32, #tpu.memory_space<vmem>>, vector<8x32xf32>
    %cst_27 = arith.constant dense<0.000000e+00> : vector<8x32xf32>
    %39 = tpu.matmul %37, %38, %cst_27 {dimension_numbers = #tpu.dot_dimension_numbers<[1], [0], [0], [1], [0, 0, 1, 1], [], []>} : vector<8x8xf32>, vector<8x32xf32>, vector<8x32xf32> -> vector<8x32xf32>
    %40 = arith.addf %19, %39 : vector<8x32xf32>
    %41 = vector.extract_strided_slice %8 {offsets = [0, 8], sizes = [8, 8], strides = [1, 1]} : vector<8x32xf32> to vector<8x8xf32>
    %42 = vector.extract_strided_slice %13 {offsets = [0, 8], sizes = [8, 8], strides = [1, 1]} : vector<8x32xf32> to vector<8x8xf32>
    %43 = vector.extract_strided_slice %18 {offsets = [0, 8], sizes = [8, 8], strides = [1, 1]} : vector<8x32xf32> to vector<8x8xf32>
    %cst_28 = arith.constant dense<0.000000e+00> : vector<8x8xf32>
    %44 = tpu.matmul %41, %42, %cst_28 {dimension_numbers = #tpu.dot_dimension_numbers<[1], [1], [0], [0], [0, 0, 1, 0], [], []>} : vector<8x8xf32>, vector<8x8xf32>, vector<8x8xf32> -> vector<8x8xf32>
    %cst_29 = arith.constant 0.353553385 : f32
    %45 = vector.broadcast %cst_29 : f32 to vector<8x8xf32>
    %46 = arith.mulf %44, %45 : vector<8x8xf32>
    %47 = vector.broadcast %3 : vector<1x8xf32> to vector<8x8xf32>
    %48 = arith.addf %46, %47 : vector<8x8xf32>
    %cst_30 = arith.constant dense<0xFF800000> : vector<8xf32>
    %49 = vector.multi_reduction <maximumf>, %48, %cst_30 [1] : vector<8x8xf32> to vector<8xf32>
    %50 = vector.shape_cast %49 : vector<8xf32> to vector<8x1xf32>
    %51 = vector.broadcast %50 : vector<8x1xf32> to vector<8x8xf32>
    %52 = arith.subf %48, %51 : vector<8x8xf32>
    %53 = math.exp %52 : vector<8x8xf32>
    %cst_31 = arith.constant dense<0.000000e+00> : vector<8xf32>
    %54 = vector.multi_reduction <add>, %53, %cst_31 [1] : vector<8x8xf32> to vector<8xf32>
    %55 = vector.shape_cast %54 : vector<8xf32> to vector<8x1xf32>
    %56 = vector.broadcast %55 : vector<8x1xf32> to vector<8x8xf32>
    %57 = arith.divf %53, %56 : vector<8x8xf32>
    %cst_32 = arith.constant dense<0.000000e+00> : vector<8x8xf32>
    %58 = tpu.matmul %57, %43, %cst_32 {dimension_numbers = #tpu.dot_dimension_numbers<[1], [0], [0], [1], [0, 0, 1, 1], [], []>} : vector<8x8xf32>, vector<8x8xf32>, vector<8x8xf32> -> vector<8x8xf32>
    %c8 = arith.constant 8 : index
    %c0_33 = arith.constant 0 : index
    %59 = vector.load %arg9[%c8, %c0_33] : memref<32x32xf32, #tpu.memory_space<vmem>>, vector<8x32xf32>
    %cst_34 = arith.constant dense<0.000000e+00> : vector<8x32xf32>
    %60 = tpu.matmul %58, %59, %cst_34 {dimension_numbers = #tpu.dot_dimension_numbers<[1], [0], [0], [1], [0, 0, 1, 1], [], []>} : vector<8x8xf32>, vector<8x32xf32>, vector<8x32xf32> -> vector<8x32xf32>
    %61 = arith.addf %40, %60 : vector<8x32xf32>
    %62 = vector.extract_strided_slice %8 {offsets = [0, 16], sizes = [8, 8], strides = [1, 1]} : vector<8x32xf32> to vector<8x8xf32>
    %63 = vector.extract_strided_slice %13 {offsets = [0, 16], sizes = [8, 8], strides = [1, 1]} : vector<8x32xf32> to vector<8x8xf32>
    %64 = vector.extract_strided_slice %18 {offsets = [0, 16], sizes = [8, 8], strides = [1, 1]} : vector<8x32xf32> to vector<8x8xf32>
    %cst_35 = arith.constant dense<0.000000e+00> : vector<8x8xf32>
    %65 = tpu.matmul %62, %63, %cst_35 {dimension_numbers = #tpu.dot_dimension_numbers<[1], [1], [0], [0], [0, 0, 1, 0], [], []>} : vector<8x8xf32>, vector<8x8xf32>, vector<8x8xf32> -> vector<8x8xf32>
    %cst_36 = arith.constant 0.353553385 : f32
    %66 = vector.broadcast %cst_36 : f32 to vector<8x8xf32>
    %67 = arith.mulf %65, %66 : vector<8x8xf32>
    %68 = vector.broadcast %3 : vector<1x8xf32> to vector<8x8xf32>
    %69 = arith.addf %67, %68 : vector<8x8xf32>
    %cst_37 = arith.constant dense<0xFF800000> : vector<8xf32>
    %70 = vector.multi_reduction <maximumf>, %69, %cst_37 [1] : vector<8x8xf32> to vector<8xf32>
    %71 = vector.shape_cast %70 : vector<8xf32> to vector<8x1xf32>
    %72 = vector.broadcast %71 : vector<8x1xf32> to vector<8x8xf32>
    %73 = arith.subf %69, %72 : vector<8x8xf32>
    %74 = math.exp %73 : vector<8x8xf32>
    %cst_38 = arith.constant dense<0.000000e+00> : vector<8xf32>
    %75 = vector.multi_reduction <add>, %74, %cst_38 [1] : vector<8x8xf32> to vector<8xf32>
    %76 = vector.shape_cast %75 : vector<8xf32> to vector<8x1xf32>
    %77 = vector.broadcast %76 : vector<8x1xf32> to vector<8x8xf32>
    %78 = arith.divf %74, %77 : vector<8x8xf32>
    %cst_39 = arith.constant dense<0.000000e+00> : vector<8x8xf32>
    %79 = tpu.matmul %78, %64, %cst_39 {dimension_numbers = #tpu.dot_dimension_numbers<[1], [0], [0], [1], [0, 0, 1, 1], [], []>} : vector<8x8xf32>, vector<8x8xf32>, vector<8x8xf32> -> vector<8x8xf32>
    %c16 = arith.constant 16 : index
    %c0_40 = arith.constant 0 : index
    %80 = vector.load %arg9[%c16, %c0_40] : memref<32x32xf32, #tpu.memory_space<vmem>>, vector<8x32xf32>
    %cst_41 = arith.constant dense<0.000000e+00> : vector<8x32xf32>
    %81 = tpu.matmul %79, %80, %cst_41 {dimension_numbers = #tpu.dot_dimension_numbers<[1], [0], [0], [1], [0, 0, 1, 1], [], []>} : vector<8x8xf32>, vector<8x32xf32>, vector<8x32xf32> -> vector<8x32xf32>
    %82 = arith.addf %61, %81 : vector<8x32xf32>
    %83 = vector.extract_strided_slice %8 {offsets = [0, 24], sizes = [8, 8], strides = [1, 1]} : vector<8x32xf32> to vector<8x8xf32>
    %84 = vector.extract_strided_slice %13 {offsets = [0, 24], sizes = [8, 8], strides = [1, 1]} : vector<8x32xf32> to vector<8x8xf32>
    %85 = vector.extract_strided_slice %18 {offsets = [0, 24], sizes = [8, 8], strides = [1, 1]} : vector<8x32xf32> to vector<8x8xf32>
    %cst_42 = arith.constant dense<0.000000e+00> : vector<8x8xf32>
    %86 = tpu.matmul %83, %84, %cst_42 {dimension_numbers = #tpu.dot_dimension_numbers<[1], [1], [0], [0], [0, 0, 1, 0], [], []>} : vector<8x8xf32>, vector<8x8xf32>, vector<8x8xf32> -> vector<8x8xf32>
    %cst_43 = arith.constant 0.353553385 : f32
    %87 = vector.broadcast %cst_43 : f32 to vector<8x8xf32>
    %88 = arith.mulf %86, %87 : vector<8x8xf32>
    %89 = vector.broadcast %3 : vector<1x8xf32> to vector<8x8xf32>
    %90 = arith.addf %88, %89 : vector<8x8xf32>
    %cst_44 = arith.constant dense<0xFF800000> : vector<8xf32>
    %91 = vector.multi_reduction <maximumf>, %90, %cst_44 [1] : vector<8x8xf32> to vector<8xf32>
    %92 = vector.shape_cast %91 : vector<8xf32> to vector<8x1xf32>
    %93 = vector.broadcast %92 : vector<8x1xf32> to vector<8x8xf32>
    %94 = arith.subf %90, %93 : vector<8x8xf32>
    %95 = math.exp %94 : vector<8x8xf32>
    %cst_45 = arith.constant dense<0.000000e+00> : vector<8xf32>
    %96 = vector.multi_reduction <add>, %95, %cst_45 [1] : vector<8x8xf32> to vector<8xf32>
    %97 = vector.shape_cast %96 : vector<8xf32> to vector<8x1xf32>
    %98 = vector.broadcast %97 : vector<8x1xf32> to vector<8x8xf32>
    %99 = arith.divf %95, %98 : vector<8x8xf32>
    %cst_46 = arith.constant dense<0.000000e+00> : vector<8x8xf32>
    %100 = tpu.matmul %99, %85, %cst_46 {dimension_numbers = #tpu.dot_dimension_numbers<[1], [0], [0], [1], [0, 0, 1, 1], [], []>} : vector<8x8xf32>, vector<8x8xf32>, vector<8x8xf32> -> vector<8x8xf32>
    %c24 = arith.constant 24 : index
    %c0_47 = arith.constant 0 : index
    %101 = vector.load %arg9[%c24, %c0_47] : memref<32x32xf32, #tpu.memory_space<vmem>>, vector<8x32xf32>
    %cst_48 = arith.constant dense<0.000000e+00> : vector<8x32xf32>
    %102 = tpu.matmul %100, %101, %cst_48 {dimension_numbers = #tpu.dot_dimension_numbers<[1], [0], [0], [1], [0, 0, 1, 1], [], []>} : vector<8x8xf32>, vector<8x32xf32>, vector<8x32xf32> -> vector<8x32xf32>
    %103 = arith.addf %82, %102 : vector<8x32xf32>
    %c0_49 = arith.constant 0 : index
    %c0_50 = arith.constant 0 : index
    %104 = vector.load %arg10[%c0_49, %c0_50] : memref<1x32xf32, #tpu.memory_space<vmem>>, vector<1x32xf32>
    %105 = vector.broadcast %104 : vector<1x32xf32> to vector<8x32xf32>
    %106 = arith.addf %103, %105 : vector<8x32xf32>
    %107 = arith.addf %106, %1 : vector<8x32xf32>
    %c0_51 = arith.constant 0 : index
    %c0_52 = arith.constant 0 : index
    %108 = vector.load %arg11[%c0_51, %c0_52] : memref<1x32xf32, #tpu.memory_space<vmem>>, vector<1x32xf32>
    %c0_53 = arith.constant 0 : index
    %c0_54 = arith.constant 0 : index
    %109 = vector.load %arg12[%c0_53, %c0_54] : memref<1x32xf32, #tpu.memory_space<vmem>>, vector<1x32xf32>
    %cst_55 = arith.constant dense<0.000000e+00> : vector<8xf32>
    %110 = vector.multi_reduction <add>, %107, %cst_55 [1] : vector<8x32xf32> to vector<8xf32>
    %111 = vector.shape_cast %110 : vector<8xf32> to vector<8x1xf32>
    %cst_56 = arith.constant 3.200000e+01 : f32
    %112 = vector.broadcast %cst_56 : f32 to vector<8x1xf32>
    %113 = arith.divf %111, %112 : vector<8x1xf32>
    %114 = vector.broadcast %113 : vector<8x1xf32> to vector<8x32xf32>
    %115 = arith.subf %107, %114 : vector<8x32xf32>
    %116 = arith.mulf %115, %115 : vector<8x32xf32>
    %cst_57 = arith.constant dense<0.000000e+00> : vector<8xf32>
    %117 = vector.multi_reduction <add>, %116, %cst_57 [1] : vector<8x32xf32> to vector<8xf32>
    %118 = vector.shape_cast %117 : vector<8xf32> to vector<8x1xf32>
    %cst_58 = arith.constant 3.200000e+01 : f32
    %119 = vector.broadcast %cst_58 : f32 to vector<8x1xf32>
    %120 = arith.divf %118, %119 : vector<8x1xf32>
    %cst_59 = arith.constant 9.99999996E-13 : f32
    %121 = vector.broadcast %cst_59 : f32 to vector<8x1xf32>
    %122 = arith.addf %120, %121 : vector<8x1xf32>
    %123 = math.rsqrt %122 : vector<8x1xf32>
    %124 = vector.broadcast %123 : vector<8x1xf32> to vector<8x32xf32>
    %125 = arith.mulf %115, %124 : vector<8x32xf32>
    %126 = vector.broadcast %108 : vector<1x32xf32> to vector<8x32xf32>
    %127 = arith.mulf %125, %126 : vector<8x32xf32>
    %128 = vector.broadcast %109 : vector<1x32xf32> to vector<8x32xf32>
    %129 = arith.addf %127, %128 : vector<8x32xf32>
    %c0_60 = arith.constant 0 : index
    %c0_61 = arith.constant 0 : index
    %130 = vector.load %arg13[%c0_60, %c0_61] : memref<32x64xf32, #tpu.memory_space<vmem>>, vector<32x64xf32>
    %cst_62 = arith.constant dense<0.000000e+00> : vector<8x64xf32>
    %131 = tpu.matmul %129, %130, %cst_62 {dimension_numbers = #tpu.dot_dimension_numbers<[1], [0], [0], [1], [0, 0, 1, 1], [], []>} : vector<8x32xf32>, vector<32x64xf32>, vector<8x64xf32> -> vector<8x64xf32>
    %c0_63 = arith.constant 0 : index
    %c0_64 = arith.constant 0 : index
    %132 = vector.load %arg14[%c0_63, %c0_64] : memref<1x64xf32, #tpu.memory_space<vmem>>, vector<1x64xf32>
    %133 = vector.broadcast %132 : vector<1x64xf32> to vector<8x64xf32>
    %134 = arith.addf %131, %133 : vector<8x64xf32>
    %cst_65 = arith.constant 5.000000e-01 : f32
    %135 = vector.broadcast %cst_65 : f32 to vector<8x64xf32>
    %136 = arith.mulf %135, %134 : vector<8x64xf32>
    %cst_66 = arith.constant 4.471500e-02 : f32
    %137 = vector.broadcast %cst_66 : f32 to vector<8x64xf32>
    %138 = arith.mulf %137, %134 : vector<8x64xf32>
    %139 = arith.mulf %138, %134 : vector<8x64xf32>
    %140 = arith.mulf %139, %134 : vector<8x64xf32>
    %141 = arith.addf %134, %140 : vector<8x64xf32>
    %cst_67 = arith.constant 0.797884583 : f32
    %142 = vector.broadcast %cst_67 : f32 to vector<8x64xf32>
    %143 = arith.mulf %142, %141 : vector<8x64xf32>
    %144 = math.tanh %143 : vector<8x64xf32>
    %cst_68 = arith.constant 1.000000e+00 : f32
    %145 = vector.broadcast %cst_68 : f32 to vector<8x64xf32>
    %146 = arith.addf %145, %144 : vector<8x64xf32>
    %147 = arith.mulf %136, %146 : vector<8x64xf32>
    %c0_69 = arith.constant 0 : index
    %c0_70 = arith.constant 0 : index
    %148 = vector.load %arg15[%c0_69, %c0_70] : memref<64x32xf32, #tpu.memory_space<vmem>>, vector<64x32xf32>
    %cst_71 = arith.constant dense<0.000000e+00> : vector<8x32xf32>
    %149 = tpu.matmul %147, %148, %cst_71 {dimension_numbers = #tpu.dot_dimension_numbers<[1], [0], [0], [1], [0, 0, 1, 1], [], []>} : vector<8x64xf32>, vector<64x32xf32>, vector<8x32xf32> -> vector<8x32xf32>
    %c0_72 = arith.constant 0 : index
    %c0_73 = arith.constant 0 : index
    %150 = vector.load %arg16[%c0_72, %c0_73] : memref<1x32xf32, #tpu.memory_space<vmem>>, vector<1x32xf32>
    %151 = vector.broadcast %150 : vector<1x32xf32> to vector<8x32xf32>
    %152 = arith.addf %149, %151 : vector<8x32xf32>
    %153 = arith.addf %152, %129 : vector<8x32xf32>
    %c0_74 = arith.constant 0 : index
    %c0_75 = arith.constant 0 : index
    %154 = vector.load %arg17[%c0_74, %c0_75] : memref<1x32xf32, #tpu.memory_space<vmem>>, vector<1x32xf32>
    %c0_76 = arith.constant 0 : index
    %c0_77 = arith.constant 0 : index
    %155 = vector.load %arg18[%c0_76, %c0_77] : memref<1x32xf32, #tpu.memory_space<vmem>>, vector<1x32xf32>
    %cst_78 = arith.constant dense<0.000000e+00> : vector<8xf32>
    %156 = vector.multi_reduction <add>, %153, %cst_78 [1] : vector<8x32xf32> to vector<8xf32>
    %157 = vector.shape_cast %156 : vector<8xf32> to vector<8x1xf32>
    %cst_79 = arith.constant 3.200000e+01 : f32
    %158 = vector.broadcast %cst_79 : f32 to vector<8x1xf32>
    %159 = arith.divf %157, %158 : vector<8x1xf32>
    %160 = vector.broadcast %159 : vector<8x1xf32> to vector<8x32xf32>
    %161 = arith.subf %153, %160 : vector<8x32xf32>
    %162 = arith.mulf %161, %161 : vector<8x32xf32>
    %cst_80 = arith.constant dense<0.000000e+00> : vector<8xf32>
    %163 = vector.multi_reduction <add>, %162, %cst_80 [1] : vector<8x32xf32> to vector<8xf32>
    %164 = vector.shape_cast %163 : vector<8xf32> to vector<8x1xf32>
    %cst_81 = arith.constant 3.200000e+01 : f32
    %165 = vector.broadcast %cst_81 : f32 to vector<8x1xf32>
    %166 = arith.divf %164, %165 : vector<8x1xf32>
    %cst_82 = arith.constant 9.99999996E-13 : f32
    %167 = vector.broadcast %cst_82 : f32 to vector<8x1xf32>
    %168 = arith.addf %166, %167 : vector<8x1xf32>
    %169 = math.rsqrt %168 : vector<8x1xf32>
    %170 = vector.broadcast %169 : vector<8x1xf32> to vector<8x32xf32>
    %171 = arith.mulf %161, %170 : vector<8x32xf32>
    %172 = vector.broadcast %154 : vector<1x32xf32> to vector<8x32xf32>
    %173 = arith.mulf %171, %172 : vector<8x32xf32>
    %174 = vector.broadcast %155 : vector<1x32xf32> to vector<8x32xf32>
    %175 = arith.addf %173, %174 : vector<8x32xf32>
    %c0_83 = arith.constant 0 : index
    %c0_84 = arith.constant 0 : index
    %c0_85 = arith.constant 0 : index
    %176 = vector.load %arg19[%c0_83, %c0_84, %c0_85] : memref<1x8x32xf32, #tpu.memory_space<vmem>>, vector<1x8x32xf32>
    %177 = vector.shape_cast %176 : vector<1x8x32xf32> to vector<8x32xf32>
    %178 = vector.shape_cast %175 : vector<8x32xf32> to vector<1x8x32xf32>
    tpu.vector_store %arg19[%c0_83, %c0_84, %c0_85], %178 {strides = array<i32>} : memref<1x8x32xf32, #tpu.memory_space<vmem>>, vector<1x8x32xf32>,
    return
  }
  func.func @transform_0(%arg0: i32) -> (i32, i32, i32) {
    %c0_i32 = arith.constant 0 : i32
    %c0_i32_0 = arith.constant 0 : i32
    %c0_i32_1 = arith.constant 0 : i32
    return %arg0, %c0_i32, %c0_i32_0 : i32, i32, i32
  }
  func.func @transform_1(%arg0: i32) -> (i32, i32, i32) {
    %c0_i32 = arith.constant 0 : i32
    %c0_i32_0 = arith.constant 0 : i32
    %c0_i32_1 = arith.constant 0 : i32
    return %arg0, %c0_i32, %c0_i32_0 : i32, i32, i32
  }
  func.func @transform_2(%arg0: i32) -> (i32, i32) {
    %c0_i32 = arith.constant 0 : i32
    %c0_i32_0 = arith.constant 0 : i32
    %c0_i32_1 = arith.constant 0 : i32
    return %c0_i32, %c0_i32_0 : i32, i32
  }
  func.func @transform_3(%arg0: i32) -> (i32, i32) {
    %c0_i32 = arith.constant 0 : i32
    %c0_i32_0 = arith.constant 0 : i32
    %c0_i32_1 = arith.constant 0 : i32
    return %c0_i32, %c0_i32_0 : i32, i32
  }
  func.func @transform_4(%arg0: i32) -> (i32, i32) {
    %c0_i32 = arith.constant 0 : i32
    %c0_i32_0 = arith.constant 0 : i32
    %c0_i32_1 = arith.constant 0 : i32
    return %c0_i32, %c0_i32_0 : i32, i32
  }
  func.func @transform_5(%arg0: i32) -> (i32, i32) {
    %c0_i32 = arith.constant 0 : i32
    %c0_i32_0 = arith.constant 0 : i32
    %c0_i32_1 = arith.constant 0 : i32
    return %c0_i32, %c0_i32_0 : i32, i32
  }
  func.func @transform_6(%arg0: i32) -> (i32, i32) {
    %c0_i32 = arith.constant 0 : i32
    %c0_i32_0 = arith.constant 0 : i32
    %c0_i32_1 = arith.constant 0 : i32
    return %c0_i32, %c0_i32_0 : i32, i32
  }
  func.func @transform_7(%arg0: i32) -> (i32, i32) {
    %c0_i32 = arith.constant 0 : i32
    %c0_i32_0 = arith.constant 0 : i32
    %c0_i32_1 = arith.constant 0 : i32
    return %c0_i32, %c0_i32_0 : i32, i32
  }
  func.func @transform_8(%arg0: i32) -> (i32, i32) {
    %c0_i32 = arith.constant 0 : i32
    %c0_i32_0 = arith.constant 0 : i32
    %c0_i32_1 = arith.constant 0 : i32
    return %c0_i32, %c0_i32_0 : i32, i32
  }
  func.func @transform_9(%arg0: i32) -> (i32, i32) {
    %c0_i32 = arith.constant 0 : i32
    %c0_i32_0 = arith.constant 0 : i32
    %c0_i32_1 = arith.constant 0 : i32
    return %c0_i32, %c0_i32_0 : i32, i32
  }
  func.func @transform_10(%arg0: i32) -> (i32, i32) {
    %c0_i32 = arith.constant 0 : i32
    %c0_i32_0 = arith.constant 0 : i32
    %c0_i32_1 = arith.constant 0 : i32
    return %c0_i32, %c0_i32_0 : i32, i32
  }
  func.func @transform_11(%arg0: i32) -> (i32, i32) {
    %c0_i32 = arith.constant 0 : i32
    %c0_i32_0 = arith.constant 0 : i32
    %c0_i32_1 = arith.constant 0 : i32
    return %c0_i32, %c0_i32_0 : i32, i32
  }
  func.func @transform_12(%arg0: i32) -> (i32, i32) {
    %c0_i32 = arith.constant 0 : i32
    %c0_i32_0 = arith.constant 0 : i32
    %c0_i32_1 = arith.constant 0 : i32
    return %c0_i32, %c0_i32_0 : i32, i32
  }
  func.func @transform_13(%arg0: i32) -> (i32, i32) {
    %c0_i32 = arith.constant 0 : i32
    %c0_i32_0 = arith.constant 0 : i32
    %c0_i32_1 = arith.constant 0 : i32
    return %c0_i32, %c0_i32_0 : i32, i32
  }
  func.func @transform_14(%arg0: i32) -> (i32, i32) {
    %c0_i32 = arith.constant 0 : i32
    %c0_i32_0 = arith.constant 0 : i32
    %c0_i32_1 = arith.constant 0 : i32
    return %c0_i32, %c0_i32_0 : i32, i32
  }
  func.func @transform_15(%arg0: i32) -> (i32, i32) {
    %c0_i32 = arith.constant 0 : i32
    %c0_i32_0 = arith.constant 0 : i32
    %c0_i32_1 = arith.constant 0 : i32
    return %c0_i32, %c0_i32_0 : i32, i32
  }
  func.func @transform_16(%arg0: i32) -> (i32, i32) {
    %c0_i32 = arith.constant 0 : i32
    %c0_i32_0 = arith.constant 0 : i32
    %c0_i32_1 = arith.constant 0 : i32
    return %c0_i32, %c0_i32_0 : i32, i32
  }
  func.func @transform_17(%arg0: i32) -> (i32, i32) {
    %c0_i32 = arith.constant 0 : i32
    %c0_i32_0 = arith.constant 0 : i32
    %c0_i32_1 = arith.constant 0 : i32
    return %c0_i32, %c0_i32_0 : i32, i32
  }
  func.func @transform_18(%arg0: i32) -> (i32, i32, i32) {
    %c0_i32 = arith.constant 0 : i32
    %c0_i32_0 = arith.constant 0 : i32
    %c0_i32_1 = arith.constant 0 : i32
    return %arg0, %c0_i32, %c0_i32_0 : i32, i32, i32
  }
}

</mosaic_0001>

<llo_original>
// kernel: tpu_custom_call.1
$region0: #{tpu_custom_call.1}
  #allocation0 [shape = 'u32[]', space=smem, size = 0x4, offset = 0x4, fixed_abs, tag = 'smem constant byte address 0x4 - core index']
  #allocation1 [shape = 'u32[144,128]{1,0:T(1,128)}', space=vmem, size = 0x12000, scoped, tag = 'internal scratch']
  %s0 = inlined_call_operand.hbm [shape: f32[2,8,32], index: 0, kind: input, shape index: {}]
  %s1 = inlined_call_operand.vmem [shape: f32[2,1,8], index: 1, kind: input, shape index: {}]
  %s2 = inlined_call_operand.vmem [shape: f32[32,32], index: 2, kind: input, shape index: {}]
  %s3 = inlined_call_operand.vmem [shape: f32[1,32], index: 3, kind: input, shape index: {}]
  %s4 = inlined_call_operand.vmem [shape: f32[32,32], index: 4, kind: input, shape index: {}]
  %s5 = inlined_call_operand.vmem [shape: f32[1,32], index: 5, kind: input, shape index: {}]
  %s6 = inlined_call_operand.vmem [shape: f32[32,32], index: 6, kind: input, shape index: {}]
  %s7 = inlined_call_operand.vmem [shape: f32[1,32], index: 7, kind: input, shape index: {}]
  %s8 = inlined_call_operand.hbm [shape: f32[32,32], index: 8, kind: input, shape index: {}]
  %s9 = inlined_call_operand.vmem [shape: f32[1,32], index: 9, kind: input, shape index: {}]
  %s10 = inlined_call_operand.vmem [shape: f32[1,32], index: 10, kind: input, shape index: {}]
  %s11 = inlined_call_operand.vmem [shape: f32[1,32], index: 11, kind: input, shape index: {}]
  %s12 = inlined_call_operand.hbm [shape: f32[32,64], index: 12, kind: input, shape index: {}]
  %s13 = inlined_call_operand.vmem [shape: f32[1,64], index: 13, kind: input, shape index: {}]
  %s14 = inlined_call_operand.vmem [shape: f32[64,32], index: 14, kind: input, shape index: {}]
  %s15 = inlined_call_operand.vmem [shape: f32[1,32], index: 15, kind: input, shape index: {}]
  %s16 = inlined_call_operand.vmem [shape: f32[1,32], index: 16, kind: input, shape index: {}]
  %s17 = inlined_call_operand.vmem [shape: f32[1,32], index: 17, kind: input, shape index: {}]
  %s18 = inlined_call_operand.hbm [shape: f32[2,8,32], index: 18, kind: output, shape index: {}]
  %s19 = sld [smem:[#allocation0]]
  $region117: #{tpu_custom_call.1} parent=0
    _
  %s21 = ssub.s32 1, %s19
  %s22 = scalar_select 0, %s21, %s19
  $region1: #{tpu_custom_call.1} parent=0
    #allocation2 [shape = 'u8[8192]{0}', space=vmem, size = 0x2000, scoped, tag = 'input window, operand 0']
    #allocation3 [shape = 's32[2]{0}', space=sflag, size = 0x8, scoped, tag = 'scoped memory for tpu_custom_call.1']
    #allocation4 [shape = 's32[2]{0}', space=sflag, size = 0x8, scoped, tag = 'scoped memory for tpu_custom_call.1']
    #allocation5 [shape = 'u8[16384]{0}', space=vmem, size = 0x4000, scoped, tag = 'input window, operand 8, single buffered']
    #allocation6 [shape = 's32[1]{0}', space=sflag, size = 0x4, scoped, tag = 'scoped memory for tpu_custom_call.1']
    #allocation7 [shape = 'u8[16384]{0}', space=vmem, size = 0x4000, scoped, tag = 'input window, operand 12, single buffered']
    #allocation8 [shape = 'u8[8192]{0}', space=vmem, size = 0x2000, scoped, tag = 'output window, operand 0']
    %23 = vsyncpa [#allocation3], 0
    %s24 = scalar_lea.sflag [#allocation3], 1
    %25 = vsyncpa %s24, 0
    %26 = vsyncpa [#allocation6], 0
    %27 = vsyncpa [#allocation4], 0
    %s28 = scalar_lea.sflag [#allocation4], 1
    %29 = vsyncpa %s28, 0
    loop: start=0, step=1, limit=4
    $region2: #{tpu_custom_call.1} parent=1 // loop_pre_header
      _
    $region3: #{tpu_custom_call.1} parent=1 // loop_header
      %s31 = sphi 0, %s35
      %p32 = scmp.ge.s32.totalorder %s31, 4
      %s41 = sphi 0, %s43
      %s44 = sphi 0, %s41
      %s45 = sphi 0, %s44
      %s61 = sphi 0, %s45
      %s67 = sphi 0, %s69
      %s70 = sphi 0, %s67
      %s71 = sphi 0, %s70
      %s87 = sphi 0, %s71
      %s91 = sphi 0, %s91
      %s93 = sphi 0, %s91
      %s94 = sphi 0, %s93
      %s108 = sphi 0, %s94
      %s112 = sphi 0, %s112
      %s114 = sphi 0, %s112
      %s115 = sphi 0, %s114
      %s129 = sphi 0, %s115
      %s133 = sphi 0, %s133
      %s135 = sphi 0, %s133
      %s136 = sphi 0, %s135
      %s150 = sphi 0, %s136
      %s154 = sphi 0, %s154
      %s156 = sphi 0, %s154
      %s157 = sphi 0, %s156
      %s171 = sphi 0, %s157
      %s175 = sphi 0, %s175
      %s177 = sphi 0, %s175
      %s178 = sphi 0, %s177
      %s192 = sphi 0, %s178
      %s196 = sphi 0, %s196
      %s198 = sphi 0, %s196
      %s199 = sphi 0, %s198
      %s213 = sphi 0, %s199
      %s217 = sphi 0, %s217
      %s219 = sphi 0, %s217
      %s220 = sphi 0, %s219
      %s234 = sphi 0, %s220
      %s238 = sphi 0, %s238
      %s240 = sphi 0, %s238
      %s241 = sphi 0, %s240
      %s255 = sphi 0, %s241
      %s259 = sphi 0, %s259
      %s261 = sphi 0, %s259
      %s262 = sphi 0, %s261
      %s276 = sphi 0, %s262
      %s280 = sphi 0, %s280
      %s282 = sphi 0, %s280
      %s283 = sphi 0, %s282
      %s297 = sphi 0, %s283
      %s301 = sphi 0, %s301
      %s303 = sphi 0, %s301
      %s304 = sphi 0, %s303
      %s318 = sphi 0, %s304
      %s322 = sphi 0, %s322
      %s324 = sphi 0, %s322
      %s325 = sphi 0, %s324
      %s339 = sphi 0, %s325
      %s343 = sphi 0, %s343
      %s345 = sphi 0, %s343
      %s346 = sphi 0, %s345
      %s360 = sphi 0, %s346
      %s364 = sphi 0, %s364
      %s366 = sphi 0, %s364
      %s367 = sphi 0, %s366
      %s381 = sphi 0, %s367
      %s385 = sphi 0, %s385
      %s387 = sphi 0, %s385
      %s388 = sphi 0, %s387
      %s402 = sphi 0, %s388
      %s406 = sphi 0, %s406
      %s408 = sphi 0, %s406
      %s409 = sphi 0, %s408
      %s423 = sphi 0, %s409
      %s429 = sphi 0, %s431
      %s432 = sphi 0, %s429
      %s433 = sphi 0, %s432
      %s449 = sphi 0, %s433
    $region4: #{tpu_custom_call.1} parent=1 // loop_header_branch
      %34 = sbr.rel (%p32) target = $region8
    $region5: #{tpu_custom_call.1} parent=1 // loop_body
      %s36 = ssub.s32 %s31, 1
      %s37 = ssub.s32 %s31, 2
      %s38 = sadd.s32 %s31, 1
      %s39 = ssub.s32 %s31, %s38
      %p40 = scmp.eq.s32.totalorder %s39, 0
      %s42 = sadd.s32 %s41, 1
      %s43 = scalar_select %p40, %s41, %s42
      %p46 = pneg %p40
      %p47 = scmp.eq.s32.totalorder %s31, 1
      %p48 = por %p46, %p47
      %p49 = scmp.ne.s32.totalorder %s41, %s44
      %p50 = scmp.eq.s32.totalorder %s31, 0
      %p51 = por %p49, %p50
      %p52 = scmp.ne.s32.totalorder %s41, %s44
      %p53 = scmp.eq.s32.totalorder %s36, 1
      %p54 = por %p52, %p53
      %p55 = scmp.ne.s32.totalorder %s44, %s45
      %p56 = scmp.eq.s32.totalorder %s36, 0
      %p57 = por %p55, %p56
      %p58 = scmp.ne.s32.totalorder %s44, %s45
      %p59 = scmp.eq.s32.totalorder %s37, 1
      %p60 = por %p58, %p59
      %p62 = scmp.ne.s32.totalorder %s45, %s61
      %p63 = scmp.eq.s32.totalorder %s37, 0
      %p64 = por %p62, %p63
      %s65 = ssub.s32 %s31, %s38
      %p66 = scmp.eq.s32.totalorder %s65, 0
      %s68 = sadd.s32 %s67, 1
      %s69 = scalar_select %p66, %s67, %s68
      %p72 = pneg %p66
      %p73 = scmp.eq.s32.totalorder %s31, 1
      %p74 = por %p72, %p73
      %p75 = scmp.ne.s32.totalorder %s67, %s70
      %p76 = scmp.eq.s32.totalorder %s31, 0
      %p77 = por %p75, %p76
      %p78 = scmp.ne.s32.totalorder %s67, %s70
      %p79 = scmp.eq.s32.totalorder %s36, 1
      %p80 = por %p78, %p79
      %p81 = scmp.ne.s32.totalorder %s70, %s71
      %p82 = scmp.eq.s32.totalorder %s36, 0
      %p83 = por %p81, %p82
      %p84 = scmp.ne.s32.totalorder %s70, %s71
      %p85 = scmp.eq.s32.totalorder %s37, 1
      %p86 = por %p84, %p85
      %p88 = scmp.ne.s32.totalorder %s71, %s87
      %p89 = scmp.eq.s32.totalorder %s37, 0
      %p90 = por %p88, %p89
      %s92 = sadd.s32 %s91, 1
      %p95 = scmp.eq.s32.totalorder %s31, 1
      %p96 = scmp.ne.s32.totalorder %s91, %s93
      %p97 = scmp.eq.s32.totalorder %s31, 0
      %p98 = por %p96, %p97
      %p99 = scmp.ne.s32.totalorder %s91, %s93
      %p100 = scmp.eq.s32.totalorder %s36, 1
      %p101 = por %p99, %p100
      %p102 = scmp.ne.s32.totalorder %s93, %s94
      %p103 = scmp.eq.s32.totalorder %s36, 0
      %p104 = por %p102, %p103
      %p105 = scmp.ne.s32.totalorder %s93, %s94
      %p106 = scmp.eq.s32.totalorder %s37, 1
      %p107 = por %p105, %p106
      %p109 = scmp.ne.s32.totalorder %s94, %s108
      %p110 = scmp.eq.s32.totalorder %s37, 0
      %p111 = por %p109, %p110
      %s113 = sadd.s32 %s112, 1
      %p116 = scmp.eq.s32.totalorder %s31, 1
      %p117 = scmp.ne.s32.totalorder %s112, %s114
      %p118 = scmp.eq.s32.totalorder %s31, 0
      %p119 = por %p117, %p118
      %p120 = scmp.ne.s32.totalorder %s112, %s114
      %p121 = scmp.eq.s32.totalorder %s36, 1
      %p122 = por %p120, %p121
      %p123 = scmp.ne.s32.totalorder %s114, %s115
      %p124 = scmp.eq.s32.totalorder %s36, 0
      %p125 = por %p123, %p124
      %p126 = scmp.ne.s32.totalorder %s114, %s115
      %p127 = scmp.eq.s32.totalorder %s37, 1
      %p128 = por %p126, %p127
      %p130 = scmp.ne.s32.totalorder %s115, %s129
      %p131 = scmp.eq.s32.totalorder %s37, 0
      %p132 = por %p130, %p131
      %s134 = sadd.s32 %s133, 1
      %p137 = scmp.eq.s32.totalorder %s31, 1
      %p138 = scmp.ne.s32.totalorder %s133, %s135
      %p139 = scmp.eq.s32.totalorder %s31, 0
      %p140 = por %p138, %p139
      %p141 = scmp.ne.s32.totalorder %s133, %s135
      %p142 = scmp.eq.s32.totalorder %s36, 1
      %p143 = por %p141, %p142
      %p144 = scmp.ne.s32.totalorder %s135, %s136
      %p145 = scmp.eq.s32.totalorder %s36, 0
      %p146 = por %p144, %p145
      %p147 = scmp.ne.s32.totalorder %s135, %s136
      %p148 = scmp.eq.s32.totalorder %s37, 1
      %p149 = por %p147, %p148
      %p151 = scmp.ne.s32.totalorder %s136, %s150
      %p152 = scmp.eq.s32.totalorder %s37, 0
      %p153 = por %p151, %p152
      %s155 = sadd.s32 %s154, 1
      %p158 = scmp.eq.s32.totalorder %s31, 1
      %p159 = scmp.ne.s32.totalorder %s154, %s156
      %p160 = scmp.eq.s32.totalorder %s31, 0
      %p161 = por %p159, %p160
      %p162 = scmp.ne.s32.totalorder %s154, %s156
      %p163 = scmp.eq.s32.totalorder %s36, 1
      %p164 = por %p162, %p163
      %p165 = scmp.ne.s32.totalorder %s156, %s157
      %p166 = scmp.eq.s32.totalorder %s36, 0
      %p167 = por %p165, %p166
      %p168 = scmp.ne.s32.totalorder %s156, %s157
      %p169 = scmp.eq.s32.totalorder %s37, 1
      %p170 = por %p168, %p169
      %p172 = scmp.ne.s32.totalorder %s157, %s171
      %p173 = scmp.eq.s32.totalorder %s37, 0
      %p174 = por %p172, %p173
      %s176 = sadd.s32 %s175, 1
      %p179 = scmp.eq.s32.totalorder %s31, 1
      %p180 = scmp.ne.s32.totalorder %s175, %s177
      %p181 = scmp.eq.s32.totalorder %s31, 0
      %p182 = por %p180, %p181
      %p183 = scmp.ne.s32.totalorder %s175, %s177
      %p184 = scmp.eq.s32.totalorder %s36, 1
      %p185 = por %p183, %p184
      %p186 = scmp.ne.s32.totalorder %s177, %s178
      %p187 = scmp.eq.s32.totalorder %s36, 0
      %p188 = por %p186, %p187
      %p189 = scmp.ne.s32.totalorder %s177, %s178
      %p190 = scmp.eq.s32.totalorder %s37, 1
      %p191 = por %p189, %p190
      %p193 = scmp.ne.s32.totalorder %s178, %s192
      %p194 = scmp.eq.s32.totalorder %s37, 0
      %p195 = por %p193, %p194
      %s197 = sadd.s32 %s196, 1
      %p200 = scmp.eq.s32.totalorder %s31, 1
      %p201 = scmp.ne.s32.totalorder %s196, %s198
      %p202 = scmp.eq.s32.totalorder %s31, 0
      %p203 = por %p201, %p202
      %p204 = scmp.ne.s32.totalorder %s196, %s198
      %p205 = scmp.eq.s32.totalorder %s36, 1
      %p206 = por %p204, %p205
      %p207 = scmp.ne.s32.totalorder %s198, %s199
      %p208 = scmp.eq.s32.totalorder %s36, 0
      %p209 = por %p207, %p208
      %p210 = scmp.ne.s32.totalorder %s198, %s199
      %p211 = scmp.eq.s32.totalorder %s37, 1
      %p212 = por %p210, %p211
      %p214 = scmp.ne.s32.totalorder %s199, %s213
      %p215 = scmp.eq.s32.totalorder %s37, 0
      %p216 = por %p214, %p215
      %s218 = sadd.s32 %s217, 1
      %p221 = scmp.eq.s32.totalorder %s31, 1
      %p222 = scmp.ne.s32.totalorder %s217, %s219
      %p223 = scmp.eq.s32.totalorder %s31, 0
      %p224 = por %p222, %p223
      %p225 = scmp.ne.s32.totalorder %s217, %s219
      %p226 = scmp.eq.s32.totalorder %s36, 1
      %p227 = por %p225, %p226
      %p228 = scmp.ne.s32.totalorder %s219, %s220
      %p229 = scmp.eq.s32.totalorder %s36, 0
      %p230 = por %p228, %p229
      %p231 = scmp.ne.s32.totalorder %s219, %s220
      %p232 = scmp.eq.s32.totalorder %s37, 1
      %p233 = por %p231, %p232
      %p235 = scmp.ne.s32.totalorder %s220, %s234
      %p236 = scmp.eq.s32.totalorder %s37, 0
      %p237 = por %p235, %p236
      %s239 = sadd.s32 %s238, 1
      %p242 = scmp.eq.s32.totalorder %s31, 1
      %p243 = scmp.ne.s32.totalorder %s238, %s240
      %p244 = scmp.eq.s32.totalorder %s31, 0
      %p245 = por %p243, %p244
      %p246 = scmp.ne.s32.totalorder %s238, %s240
      %p247 = scmp.eq.s32.totalorder %s36, 1
      %p248 = por %p246, %p247
      %p249 = scmp.ne.s32.totalorder %s240, %s241
      %p250 = scmp.eq.s32.totalorder %s36, 0
      %p251 = por %p249, %p250
      %p252 = scmp.ne.s32.totalorder %s240, %s241
      %p253 = scmp.eq.s32.totalorder %s37, 1
      %p254 = por %p252, %p253
      %p256 = scmp.ne.s32.totalorder %s241, %s255
      %p257 = scmp.eq.s32.totalorder %s37, 0
      %p258 = por %p256, %p257
      %s260 = sadd.s32 %s259, 1
      %p263 = scmp.eq.s32.totalorder %s31, 1
      %p264 = scmp.ne.s32.totalorder %s259, %s261
      %p265 = scmp.eq.s32.totalorder %s31, 0
      %p266 = por %p264, %p265
      %p267 = scmp.ne.s32.totalorder %s259, %s261
      %p268 = scmp.eq.s32.totalorder %s36, 1
      %p269 = por %p267, %p268
      %p270 = scmp.ne.s32.totalorder %s261, %s262
      %p271 = scmp.eq.s32.totalorder %s36, 0
      %p272 = por %p270, %p271
      %p273 = scmp.ne.s32.totalorder %s261, %s262
      %p274 = scmp.eq.s32.totalorder %s37, 1
      %p275 = por %p273, %p274
      %p277 = scmp.ne.s32.totalorder %s262, %s276
      %p278 = scmp.eq.s32.totalorder %s37, 0
      %p279 = por %p277, %p278
      %s281 = sadd.s32 %s280, 1
      %p284 = scmp.eq.s32.totalorder %s31, 1
      %p285 = scmp.ne.s32.totalorder %s280, %s282
      %p286 = scmp.eq.s32.totalorder %s31, 0
      %p287 = por %p285, %p286
      %p288 = scmp.ne.s32.totalorder %s280, %s282
      %p289 = scmp.eq.s32.totalorder %s36, 1
      %p290 = por %p288, %p289
      %p291 = scmp.ne.s32.totalorder %s282, %s283
      %p292 = scmp.eq.s32.totalorder %s36, 0
      %p293 = por %p291, %p292
      %p294 = scmp.ne.s32.totalorder %s282, %s283
      %p295 = scmp.eq.s32.totalorder %s37, 1
      %p296 = por %p294, %p295
      %p298 = scmp.ne.s32.totalorder %s283, %s297
      %p299 = scmp.eq.s32.totalorder %s37, 0
      %p300 = por %p298, %p299
      %s302 = sadd.s32 %s301, 1
      %p305 = scmp.eq.s32.totalorder %s31, 1
      %p306 = scmp.ne.s32.totalorder %s301, %s303
      %p307 = scmp.eq.s32.totalorder %s31, 0
      %p308 = por %p306, %p307
      %p309 = scmp.ne.s32.totalorder %s301, %s303
      %p310 = scmp.eq.s32.totalorder %s36, 1
      %p311 = por %p309, %p310
      %p312 = scmp.ne.s32.totalorder %s303, %s304
      %p313 = scmp.eq.s32.totalorder %s36, 0
      %p314 = por %p312, %p313
      %p315 = scmp.ne.s32.totalorder %s303, %s304
      %p316 = scmp.eq.s32.totalorder %s37, 1
      %p317 = por %p315, %p316
      %p319 = scmp.ne.s32.totalorder %s304, %s318
      %p320 = scmp.eq.s32.totalorder %s37, 0
      %p321 = por %p319, %p320
      %s323 = sadd.s32 %s322, 1
      %p326 = scmp.eq.s32.totalorder %s31, 1
      %p327 = scmp.ne.s32.totalorder %s322, %s324
      %p328 = scmp.eq.s32.totalorder %s31, 0
      %p329 = por %p327, %p328
      %p330 = scmp.ne.s32.totalorder %s322, %s324
      %p331 = scmp.eq.s32.totalorder %s36, 1
      %p332 = por %p330, %p331
      %p333 = scmp.ne.s32.totalorder %s324, %s325
      %p334 = scmp.eq.s32.totalorder %s36, 0
      %p335 = por %p333, %p334
      %p336 = scmp.ne.s32.totalorder %s324, %s325
      %p337 = scmp.eq.s32.totalorder %s37, 1
      %p338 = por %p336, %p337
      %p340 = scmp.ne.s32.totalorder %s325, %s339
      %p341 = scmp.eq.s32.totalorder %s37, 0
      %p342 = por %p340, %p341
      %s344 = sadd.s32 %s343, 1
      %p347 = scmp.eq.s32.totalorder %s31, 1
      %p348 = scmp.ne.s32.totalorder %s343, %s345
      %p349 = scmp.eq.s32.totalorder %s31, 0
      %p350 = por %p348, %p349
      %p351 = scmp.ne.s32.totalorder %s343, %s345
      %p352 = scmp.eq.s32.totalorder %s36, 1
      %p353 = por %p351, %p352
      %p354 = scmp.ne.s32.totalorder %s345, %s346
      %p355 = scmp.eq.s32.totalorder %s36, 0
      %p356 = por %p354, %p355
      %p357 = scmp.ne.s32.totalorder %s345, %s346
      %p358 = scmp.eq.s32.totalorder %s37, 1
      %p359 = por %p357, %p358
      %p361 = scmp.ne.s32.totalorder %s346, %s360
      %p362 = scmp.eq.s32.totalorder %s37, 0
      %p363 = por %p361, %p362
      %s365 = sadd.s32 %s364, 1
      %p368 = scmp.eq.s32.totalorder %s31, 1
      %p369 = scmp.ne.s32.totalorder %s364, %s366
      %p370 = scmp.eq.s32.totalorder %s31, 0
      %p371 = por %p369, %p370
      %p372 = scmp.ne.s32.totalorder %s364, %s366
      %p373 = scmp.eq.s32.totalorder %s36, 1
      %p374 = por %p372, %p373
      %p375 = scmp.ne.s32.totalorder %s366, %s367
      %p376 = scmp.eq.s32.totalorder %s36, 0
      %p377 = por %p375, %p376
      %p378 = scmp.ne.s32.totalorder %s366, %s367
      %p379 = scmp.eq.s32.totalorder %s37, 1
      %p380 = por %p378, %p379
      %p382 = scmp.ne.s32.totalorder %s367, %s381
      %p383 = scmp.eq.s32.totalorder %s37, 0
      %p384 = por %p382, %p383
      %s386 = sadd.s32 %s385, 1
      %p389 = scmp.eq.s32.totalorder %s31, 1
      %p390 = scmp.ne.s32.totalorder %s385, %s387
      %p391 = scmp.eq.s32.totalorder %s31, 0
      %p392 = por %p390, %p391
      %p393 = scmp.ne.s32.totalorder %s385, %s387
      %p394 = scmp.eq.s32.totalorder %s36, 1
      %p395 = por %p393, %p394
      %p396 = scmp.ne.s32.totalorder %s387, %s388
      %p397 = scmp.eq.s32.totalorder %s36, 0
      %p398 = por %p396, %p397
      %p399 = scmp.ne.s32.totalorder %s387, %s388
      %p400 = scmp.eq.s32.totalorder %s37, 1
      %p401 = por %p399, %p400
      %p403 = scmp.ne.s32.totalorder %s388, %s402
      %p404 = scmp.eq.s32.totalorder %s37, 0
      %p405 = por %p403, %p404
      %s407 = sadd.s32 %s406, 1
      %p410 = scmp.eq.s32.totalorder %s31, 1
      %p411 = scmp.ne.s32.totalorder %s406, %s408
      %p412 = scmp.eq.s32.totalorder %s31, 0
      %p413 = por %p411, %p412
      %p414 = scmp.ne.s32.totalorder %s406, %s408
      %p415 = scmp.eq.s32.totalorder %s36, 1
      %p416 = por %p414, %p415
      %p417 = scmp.ne.s32.totalorder %s408, %s409
      %p418 = scmp.eq.s32.totalorder %s36, 0
      %p419 = por %p417, %p418
      %p420 = scmp.ne.s32.totalorder %s408, %s409
      %p421 = scmp.eq.s32.totalorder %s37, 1
      %p422 = por %p420, %p421
      %p424 = scmp.ne.s32.totalorder %s409, %s423
      %p425 = scmp.eq.s32.totalorder %s37, 0
      %p426 = por %p424, %p425
      %s427 = ssub.s32 %s31, %s38
      %p428 = scmp.eq.s32.totalorder %s427, 0
      %s430 = sadd.s32 %s429, 1
      %s431 = scalar_select %p428, %s429, %s430
      %p434 = pneg %p428
      %p435 = scmp.eq.s32.totalorder %s31, 1
      %p436 = por %p434, %p435
      %p437 = scmp.ne.s32.totalorder %s429, %s432
      %p438 = scmp.eq.s32.totalorder %s31, 0
      %p439 = por %p437, %p438
      %p440 = scmp.ne.s32.totalorder %s429, %s432
      %p441 = scmp.eq.s32.totalorder %s36, 1
      %p442 = por %p440, %p441
      %p443 = scmp.ne.s32.totalorder %s432, %s433
      %p444 = scmp.eq.s32.totalorder %s36, 0
      %p445 = por %p443, %p444
      %p446 = scmp.ne.s32.totalorder %s432, %s433
      %p447 = scmp.eq.s32.totalorder %s37, 1
      %p448 = por %p446, %p447
      %p450 = scmp.ne.s32.totalorder %s433, %s449
      %p451 = scmp.eq.s32.totalorder %s37, 0
      %p452 = por %p450, %p451
      %p453 = scmp.le.s32.totalorder 1, %s31
      %p454 = scmp.lt.s32.totalorder %s31, 3
      %p455 = pnand %p453, %p454
      %p456 = pneg %p455
      // Predicated region
      $region9: #{tpu_custom_call.1} parent=5 // pred_check
        _
      $region10: #{tpu_custom_call.1} parent=5 // pred_check_branch
        %458 = sbr.rel (%p455) target = $region12
      $region11: #{tpu_custom_call.1} parent=5 // pred_region
        %s459 = ssub.s32 %s31, 1
        // Predicated region
        $region13: #{tpu_custom_call.1} parent=11 // pred_check
          %p460 = pneg %p104
        $region14: #{tpu_custom_call.1} parent=11 // pred_check_branch
          %462 = sbr.rel (%p460) target = $region16
        $region15: #{tpu_custom_call.1} parent=11 // pred_region
          _
        $region16: #{tpu_custom_call.1} parent=11 // pred_fallthru
          _
        // Predicated region
        $region17: #{tpu_custom_call.1} parent=11 // pred_check
          %p463 = pneg %p125
        $region18: #{tpu_custom_call.1} parent=11 // pred_check_branch
          %465 = sbr.rel (%p463) target = $region20
        $region19: #{tpu_custom_call.1} parent=11 // pred_region
          _
        $region20: #{tpu_custom_call.1} parent=11 // pred_fallthru
          _
        // Predicated region
        $region21: #{tpu_custom_call.1} parent=11 // pred_check
          %p466 = pneg %p146
        $region22: #{tpu_custom_call.1} parent=11 // pred_check_branch
          %468 = sbr.rel (%p466) target = $region24
        $region23: #{tpu_custom_call.1} parent=11 // pred_region
          _
        $region24: #{tpu_custom_call.1} parent=11 // pred_fallthru
          _
        // Predicated region
        $region25: #{tpu_custom_call.1} parent=11 // pred_check
          %p469 = pneg %p167
        $region26: #{tpu_custom_call.1} parent=11 // pred_check_branch
          %471 = sbr.rel (%p469) target = $region28
        $region27: #{tpu_custom_call.1} parent=11 // pred_region
          _
        $region28: #{tpu_custom_call.1} parent=11 // pred_fallthru
          _
        // Predicated region
        $region29: #{tpu_custom_call.1} parent=11 // pred_check
          %p472 = pneg %p188
        $region30: #{tpu_custom_call.1} parent=11 // pred_check_branch
          %474 = sbr.rel (%p472) target = $region32
        $region31: #{tpu_custom_call.1} parent=11 // pred_region
          _
        $region32: #{tpu_custom_call.1} parent=11 // pred_fallthru
          _
        // Predicated region
        $region33: #{tpu_custom_call.1} parent=11 // pred_check
          %p475 = pneg %p209
        $region34: #{tpu_custom_call.1} parent=11 // pred_check_branch
          %477 = sbr.rel (%p475) target = $region36
        $region35: #{tpu_custom_call.1} parent=11 // pred_region
          _
        $region36: #{tpu_custom_call.1} parent=11 // pred_fallthru
          _
        // Predicated region
        $region37: #{tpu_custom_call.1} parent=11 // pred_check
          %p478 = pneg %p230
        $region38: #{tpu_custom_call.1} parent=11 // pred_check_branch
          %480 = sbr.rel (%p478) target = $region40
        $region39: #{tpu_custom_call.1} parent=11 // pred_region
          %s482 = ssub.s32 512, 512
          %483 = vsyncadd [#allocation6], %s482
          %s484 = sshll.u32 [#allocation5], 4
          %s485 = int_to_ptr.vmem [resolvable:$true] %s484
          %490 = dma.hbm_to_vmem [thread:$0]  %s8, 512, %s485, [#allocation6], 128, 128, 8
        $region40: #{tpu_custom_call.1} parent=11 // pred_fallthru
          _
        // Predicated region
        $region41: #{tpu_custom_call.1} parent=11 // pred_check
          %p491 = pneg %p251
        $region42: #{tpu_custom_call.1} parent=11 // pred_check_branch
          %493 = sbr.rel (%p491) target = $region44
        $region43: #{tpu_custom_call.1} parent=11 // pred_region
          _
        $region44: #{tpu_custom_call.1} parent=11 // pred_fallthru
          _
        // Predicated region
        $region45: #{tpu_custom_call.1} parent=11 // pred_check
          %p494 = pneg %p272
        $region46: #{tpu_custom_call.1} parent=11 // pred_check_branch
          %496 = sbr.rel (%p494) target = $region48
        $region47: #{tpu_custom_call.1} parent=11 // pred_region
          _
        $region48: #{tpu_custom_call.1} parent=11 // pred_fallthru
          _
        // Predicated region
        $region49: #{tpu_custom_call.1} parent=11 // pred_check
          %p497 = pneg %p293
        $region50: #{tpu_custom_call.1} parent=11 // pred_check_branch
          %499 = sbr.rel (%p497) target = $region52
        $region51: #{tpu_custom_call.1} parent=11 // pred_region
          _
        $region52: #{tpu_custom_call.1} parent=11 // pred_fallthru
          _
        // Predicated region
        $region53: #{tpu_custom_call.1} parent=11 // pred_check
          %p500 = pneg %p314
        $region54: #{tpu_custom_call.1} parent=11 // pred_check_branch
          %502 = sbr.rel (%p500) target = $region56
        $region55: #{tpu_custom_call.1} parent=11 // pred_region
          %s504 = ssub.s32 512, 512
          %505 = vsyncadd [#allocation6], %s504
          %s506 = sshll.u32 [#allocation7], 4
          %s507 = int_to_ptr.vmem [resolvable:$true] %s506
          %512 = dma.hbm_to_vmem [thread:$0]  %s12, 512, %s507, [#allocation6], 128, 128, 8
        $region56: #{tpu_custom_call.1} parent=11 // pred_fallthru
          _
        // Predicated region
        $region57: #{tpu_custom_call.1} parent=11 // pred_check
          %p513 = pneg %p335
        $region58: #{tpu_custom_call.1} parent=11 // pred_check_branch
          %515 = sbr.rel (%p513) target = $region60
        $region59: #{tpu_custom_call.1} parent=11 // pred_region
          _
        $region60: #{tpu_custom_call.1} parent=11 // pred_fallthru
          _
        // Predicated region
        $region61: #{tpu_custom_call.1} parent=11 // pred_check
          %p516 = pneg %p356
        $region62: #{tpu_custom_call.1} parent=11 // pred_check_branch
          %518 = sbr.rel (%p516) target = $region64
        $region63: #{tpu_custom_call.1} parent=11 // pred_region
          _
        $region64: #{tpu_custom_call.1} parent=11 // pred_fallthru
          _
        // Predicated region
        $region65: #{tpu_custom_call.1} parent=11 // pred_check
          %p519 = pneg %p377
        $region66: #{tpu_custom_call.1} parent=11 // pred_check_branch
          %521 = sbr.rel (%p519) target = $region68
        $region67: #{tpu_custom_call.1} parent=11 // pred_region
          _
        $region68: #{tpu_custom_call.1} parent=11 // pred_fallthru
          _
        // Predicated region
        $region69: #{tpu_custom_call.1} parent=11 // pred_check
          %p522 = pneg %p398
        $region70: #{tpu_custom_call.1} parent=11 // pred_check_branch
          %524 = sbr.rel (%p522) target = $region72
        $region71: #{tpu_custom_call.1} parent=11 // pred_region
          _
        $region72: #{tpu_custom_call.1} parent=11 // pred_fallthru
          _
        // Predicated region
        $region73: #{tpu_custom_call.1} parent=11 // pred_check
          %p525 = pneg %p419
        $region74: #{tpu_custom_call.1} parent=11 // pred_check_branch
          %527 = sbr.rel (%p525) target = $region76
        $region75: #{tpu_custom_call.1} parent=11 // pred_region
          _
        $region76: #{tpu_custom_call.1} parent=11 // pred_fallthru
          _
      $region12: #{tpu_custom_call.1} parent=5 // pred_fallthru
        _
      %p528 = scmp.lt.s32.totalorder %s31, 2
      // Predicated region
      $region77: #{tpu_custom_call.1} parent=5 // pred_check
        %p529 = pneg %p528
      $region78: #{tpu_custom_call.1} parent=5 // pred_check_branch
        %531 = sbr.rel (%p529) target = $region80
      $region79: #{tpu_custom_call.1} parent=5 // pred_region
        // Predicated region
        $region81: #{tpu_custom_call.1} parent=79 // pred_check
          %p532 = pneg %p51
        $region82: #{tpu_custom_call.1} parent=79 // pred_check_branch
          %534 = sbr.rel (%p532) target = $region84
        $region83: #{tpu_custom_call.1} parent=79 // pred_region
          %s535 = sand.u32 %s41, 1
          %s536 = scalar_lea.sflag [#allocation3], %s535
          %s537 = sand.u32 %s41, 1
          %s538 = smul.addr %s537, 8
          %s539 = scalar_lea.vmem [#allocation2], %s538
          %s541 = ssub.s32 128, 128
          %542 = vsyncadd %s536, %s541
          %s543 = smul.addr %s31, 128
          %s544 = scalar_lea.hbm %s0, %s543
          %s546 = sshll.u32 %s539, 4
          %s547 = int_to_ptr.vmem [resolvable:$true] %s546
          %549 = dma.hbm_to_vmem [thread:$0]  %s544, 128, %s547, %s536
        $region84: #{tpu_custom_call.1} parent=79 // pred_fallthru
          _
        // Predicated region
        $region85: #{tpu_custom_call.1} parent=79 // pred_check
          %p550 = pneg %p77
        $region86: #{tpu_custom_call.1} parent=79 // pred_check_branch
          %552 = sbr.rel (%p550) target = $region88
        $region87: #{tpu_custom_call.1} parent=79 // pred_region
          %p553 = scmp.lt.s32.totalorder %s31, 1
          %s554 = scalar_select %p553, %s31, 1
          %s555 = scalar_lea.vmem %s1, %s554
        $region88: #{tpu_custom_call.1} parent=79 // pred_fallthru
          _
      $region80: #{tpu_custom_call.1} parent=5 // pred_fallthru
        _
      %p556 = scmp.le.s32.totalorder 1, %s31
      %p557 = scmp.lt.s32.totalorder %s31, 3
      %p558 = pnand %p556, %p557
      %p559 = pneg %p558
      // Predicated region
      $region89: #{tpu_custom_call.1} parent=5 // pred_check
        _
      $region90: #{tpu_custom_call.1} parent=5 // pred_check_branch
        %561 = sbr.rel (%p558) target = $region92
      $region91: #{tpu_custom_call.1} parent=5 // pred_region
        %s562 = ssub.s32 %s31, 1
        %s563 = sand.u32 %s44, 1
        %s564 = scalar_lea.sflag [#allocation3], %s563
        %s565 = sand.u32 %s44, 1
        %s566 = smul.addr %s565, 8
        %s567 = scalar_lea.vmem [#allocation2], %s566
        // Predicated region
        $region93: #{tpu_custom_call.1} parent=91 // pred_check
          %p568 = pneg %p57
        $region94: #{tpu_custom_call.1} parent=91 // pred_check_branch
          %570 = sbr.rel (%p568) target = $region96
        $region95: #{tpu_custom_call.1} parent=91 // pred_region
          %571 = dma.done %s564, 128
        $region96: #{tpu_custom_call.1} parent=91 // pred_fallthru
          _
        // Predicated region
        $region97: #{tpu_custom_call.1} parent=91 // pred_check
          %p572 = pneg %p230
        $region98: #{tpu_custom_call.1} parent=91 // pred_check_branch
          %574 = sbr.rel (%p572) target = $region100
        $region99: #{tpu_custom_call.1} parent=91 // pred_region
          %575 = dma.done [#allocation6], 512
        $region100: #{tpu_custom_call.1} parent=91 // pred_fallthru
          _
        // Predicated region
        $region101: #{tpu_custom_call.1} parent=91 // pred_check
          %p576 = pneg %p314
        $region102: #{tpu_custom_call.1} parent=91 // pred_check_branch
          %578 = sbr.rel (%p576) target = $region104
        $region103: #{tpu_custom_call.1} parent=91 // pred_region
          %579 = dma.done [#allocation6], 512
        $region104: #{tpu_custom_call.1} parent=91 // pred_fallthru
          _
        %s580 = sand.u32 %s44, 1
        %s581 = scalar_lea.sflag [#allocation3], %s580
        %s582 = sand.u32 %s44, 1
        %s583 = smul.addr %s582, 8
        %s584 = scalar_lea.vmem [#allocation2], %s583
        %p585 = pneg %p57
        %p586 = pneg %p54
        %p587 = scmp.lt.s32.totalorder %s36, 1
        %s588 = scalar_select %p587, %s36, 1
        %s589 = scalar_lea.vmem %s1, %s588
        %p590 = pneg %p83
        %p591 = pneg %p80
        %p592 = pneg %p104
        %p593 = pneg %p101
        %p594 = pneg %p125
        %p595 = pneg %p122
        %p596 = pneg %p146
        %p597 = pneg %p143
        %p598 = pneg %p167
        %p599 = pneg %p164
        %p600 = pneg %p188
        %p601 = pneg %p185
        %p602 = pneg %p209
        %p603 = pneg %p206
        %p604 = pneg %p230
        %p605 = pneg %p227
        %p606 = pneg %p251
        %p607 = pneg %p248
        %p608 = pneg %p272
        %p609 = pneg %p269
        %p610 = pneg %p293
        %p611 = pneg %p290
        %p612 = pneg %p314
        %p613 = pneg %p311
        %p614 = pneg %p335
        %p615 = pneg %p332
        %p616 = pneg %p356
        %p617 = pneg %p353
        %p618 = pneg %p377
        %p619 = pneg %p374
        %p620 = pneg %p398
        %p621 = pneg %p395
        %p622 = pneg %p419
        %p623 = pneg %p416
        %p624 = pneg %p445
        %p625 = pneg %p442
        %s626 = sand.u32 %s432, 1
        %s627 = scalar_lea.sflag [#allocation4], %s626
        %s628 = sand.u32 %s432, 1
        %s629 = smul.addr %s628, 8
        %s630 = scalar_lea.vmem [#allocation8], %s629
        %p631 = scmp.lt.s32.totalorder %s36, 1
        %s632 = scalar_select %p631, %s36, 1
        %s633 = scalar_lea.vmem %s1, %s632
        %v634 = vld [vmem:[%s567] sm:$0xff]
        %v635 = vld [vmem:[%s633] sm:$0x1]
        %v636 = vld [vmem:[%s2] sm:$0xff]
        %v637 = vld [vmem:[%s2 + $0x8] sm:$0xff]
        %v638 = vld [vmem:[%s2 + $0x10] sm:$0xff]
        %v639 = vld [vmem:[%s2 + $0x18] sm:$0xff]
        %v640 = vld [vmem:[%s3] sm:$0x1]
        %v642 = vlaneseq
        %v643 = vshrl.u32 %v642, 7
        %v644 = vsub.s32 0, %v643
        %v645 = vrot.slane %v640, %v644
        %vm647 = vcmask 261120
        %v649 = vsel %vm647, %v634, 0
        %651 = vmatprep.subr.mxu0 0.0
        %652 = vmatpush1.msra.mxu0 %v636
        %653 = vmatprep.subr.mxu0 0.0
        %654 = vmatpush1.msra.mxu0 %v637
        %655 = vmatprep.subr.mxu0 0.0
        %656 = vmatpush1.msra.mxu0 %v638
        %657 = vmatprep.subr.mxu0 0.0
        %658 = vmatpush1.msra.mxu0 %v639
        %659 = vmatprep.subr.mxu0 0.0
        %660 = vmatpush1.msra.mxu0 0.0
        %661 = vmatprep.subr.mxu0 0.0
        %662 = vmatpush1.msra.mxu0 0.0
        %663 = vmatprep.subr.mxu0 0.0
        %664 = vmatpush1.msra.mxu0 0.0
        %665 = vmatprep.subr.mxu0 0.0
        %666 = vmatpush1.msra.mxu0 0.0
        %667 = vmatprep.subr.mxu0 0.0
        %668 = vmatpush1.msra.mxu0 0.0
        %669 = vmatprep.subr.mxu0 0.0
        %670 = vmatpush1.msra.mxu0 0.0
        %671 = vmatprep.subr.mxu0 0.0
        %672 = vmatpush1.msra.mxu0 0.0
        %673 = vmatprep.subr.mxu0 0.0
        %674 = vmatpush1.msra.mxu0 0.0
        %675 = vmatprep.subr.mxu0 0.0
        %676 = vmatpush1.msra.mxu0 0.0
        %677 = vmatprep.subr.mxu0 0.0
        %678 = vmatpush1.msra.mxu0 0.0
        %679 = vmatprep.subr.mxu0 0.0
        %680 = vmatpush1.msra.mxu0 0.0
        %681 = vmatprep.subr.mxu0 0.0
        %682 = vmatpush1.msra.mxu0 0.0
        %683 = vmatprep.subr.mxu0 0.0
        %684 = vmatpush1.msra.mxu0 0.0
        %685 = vmatprep.subr.mxu0 0.0
        %686 = vmatpush1.msra.mxu0 0.0
        %687 = vmatprep.subr.mxu0 0.0
        %688 = vmatpush1.msra.mxu0 0.0
        %689 = vmatprep.subr.mxu0 0.0
        %690 = vmatpush1.msra.mxu0 0.0
        %691 = vmatprep.subr.mxu0 0.0
        %692 = vmatpush1.msra.mxu0 0.0
        %693 = vmatprep.subr.mxu0 0.0
        %694 = vmatpush1.msra.mxu0 0.0
        %695 = vmatprep.subr.mxu0 0.0
        %696 = vmatpush1.msra.mxu0 0.0
        %697 = vmatprep.subr.mxu0 0.0
        %698 = vmatpush1.msra.mxu0 0.0
        %699 = vmatprep.subr.mxu0 0.0
        %700 = vmatpush1.msra.mxu0 0.0
        %701 = vmatprep.subr.mxu0 0.0
        %702 = vmatpush1.msra.mxu0 0.0
        %703 = vmatprep.subr.mxu0 0.0
        %704 = vmatpush1.msra.mxu0 0.0
        %705 = vmatprep.subr.mxu0 0.0
        %706 = vmatpush1.msra.mxu0 0.0
        %707 = vmatprep.subr.mxu0 0.0
        %708 = vmatpush1.msra.mxu0 0.0
        %709 = vmatprep.subr.mxu0 0.0
        %710 = vmatpush1.msra.mxu0 0.0
        %711 = vmatprep.subr.mxu0 0.0
        %712 = vmatpush1.msra.mxu0 0.0
        %713 = vmatprep.subr.mxu0 0.0
        %714 = vmatpush1.msra.mxu0 0.0
        %715 = vmatprep.mubr.f32.mxu0 0.0
        %716 = vmatmul.mubr.f32.gmra.mrb[0].mxu0 %v649
        %v717 = vpop.f32.mrb[0].mxu0
        %v718 = vadd.f32 %v645, %v717
        %v719 = vpop.f32.mrb[0].mxu0
        %720 = vdwg.mxu0
        %v721 = vld [vmem:[%s4] sm:$0xff]
        %v722 = vld [vmem:[%s4 + $0x8] sm:$0xff]
        %v723 = vld [vmem:[%s4 + $0x10] sm:$0xff]
        %v724 = vld [vmem:[%s4 + $0x18] sm:$0xff]
        %v725 = vld [vmem:[%s5] sm:$0x1]
        %v727 = vlaneseq
        %v728 = vshrl.u32 %v727, 7
        %v729 = vsub.s32 0, %v728
        %v730 = vrot.slane %v725, %v729
        %732 = vmatprep.subr.mxu0 0.0
        %733 = vmatpush1.msra.mxu0 %v721
        %734 = vmatprep.subr.mxu0 0.0
        %735 = vmatpush1.msra.mxu0 %v722
        %736 = vmatprep.subr.mxu0 0.0
        %737 = vmatpush1.msra.mxu0 %v723
        %738 = vmatprep.subr.mxu0 0.0
        %739 = vmatpush1.msra.mxu0 %v724
        %740 = vmatprep.subr.mxu0 0.0
        %741 = vmatpush1.msra.mxu0 0.0
        %742 = vmatprep.subr.mxu0 0.0
        %743 = vmatpush1.msra.mxu0 0.0
        %744 = vmatprep.subr.mxu0 0.0
        %745 = vmatpush1.msra.mxu0 0.0
        %746 = vmatprep.subr.mxu0 0.0
        %747 = vmatpush1.msra.mxu0 0.0
        %748 = vmatprep.subr.mxu0 0.0
        %749 = vmatpush1.msra.mxu0 0.0
        %750 = vmatprep.subr.mxu0 0.0
        %751 = vmatpush1.msra.mxu0 0.0
        %752 = vmatprep.subr.mxu0 0.0
        %753 = vmatpush1.msra.mxu0 0.0
        %754 = vmatprep.subr.mxu0 0.0
        %755 = vmatpush1.msra.mxu0 0.0
        %756 = vmatprep.subr.mxu0 0.0
        %757 = vmatpush1.msra.mxu0 0.0
        %758 = vmatprep.subr.mxu0 0.0
        %759 = vmatpush1.msra.mxu0 0.0
        %760 = vmatprep.subr.mxu0 0.0
        %761 = vmatpush1.msra.mxu0 0.0
        %762 = vmatprep.subr.mxu0 0.0
        %763 = vmatpush1.msra.mxu0 0.0
        %764 = vmatprep.subr.mxu0 0.0
        %765 = vmatpush1.msra.mxu0 0.0
        %766 = vmatprep.subr.mxu0 0.0
        %767 = vmatpush1.msra.mxu0 0.0
        %768 = vmatprep.subr.mxu0 0.0
        %769 = vmatpush1.msra.mxu0 0.0
        %770 = vmatprep.subr.mxu0 0.0
        %771 = vmatpush1.msra.mxu0 0.0
        %772 = vmatprep.subr.mxu0 0.0
        %773 = vmatpush1.msra.mxu0 0.0
        %774 = vmatprep.subr.mxu0 0.0
        %775 = vmatpush1.msra.mxu0 0.0
        %776 = vmatprep.subr.mxu0 0.0
        %777 = vmatpush1.msra.mxu0 0.0
        %778 = vmatprep.subr.mxu0 0.0
        %779 = vmatpush1.msra.mxu0 0.0
        %780 = vmatprep.subr.mxu0 0.0
        %781 = vmatpush1.msra.mxu0 0.0
        %782 = vmatprep.subr.mxu0 0.0
        %783 = vmatpush1.msra.mxu0 0.0
        %784 = vmatprep.subr.mxu0 0.0
        %785 = vmatpush1.msra.mxu0 0.0
        %786 = vmatprep.subr.mxu0 0.0
        %787 = vmatpush1.msra.mxu0 0.0
        %788 = vmatprep.subr.mxu0 0.0
        %789 = vmatpush1.msra.mxu0 0.0
        %790 = vmatprep.subr.mxu0 0.0
        %791 = vmatpush1.msra.mxu0 0.0
        %792 = vmatprep.subr.mxu0 0.0
        %793 = vmatpush1.msra.mxu0 0.0
        %794 = vmatprep.subr.mxu0 0.0
        %795 = vmatpush1.msra.mxu0 0.0
        %796 = vmatprep.mubr.f32.mxu0 0.0
        %797 = vmatmul.mubr.f32.gmra.mrb[0].mxu0 %v649
        %v798 = vpop.f32.mrb[0].mxu0
        %v799 = vadd.f32 %v730, %v798
        %v800 = vpop.f32.mrb[0].mxu0
        %801 = vdwg.mxu0
        %v802 = vld [vmem:[%s6] sm:$0xff]
        %v803 = vld [vmem:[%s6 + $0x8] sm:$0xff]
        %v804 = vld [vmem:[%s6 + $0x10] sm:$0xff]
        %v805 = vld [vmem:[%s6 + $0x18] sm:$0xff]
        %v806 = vld [vmem:[%s7] sm:$0x1]
        %v808 = vlaneseq
        %v809 = vshrl.u32 %v808, 7
        %v810 = vsub.s32 0, %v809
        %v811 = vrot.slane %v806, %v810
        %813 = vmatprep.subr.mxu0 0.0
        %814 = vmatpush1.msra.mxu0 %v802
        %815 = vmatprep.subr.mxu0 0.0
        %816 = vmatpush1.msra.mxu0 %v803
        %817 = vmatprep.subr.mxu0 0.0
        %818 = vmatpush1.msra.mxu0 %v804
        %819 = vmatprep.subr.mxu0 0.0
        %820 = vmatpush1.msra.mxu0 %v805
        %821 = vmatprep.subr.mxu0 0.0
        %822 = vmatpush1.msra.mxu0 0.0
        %823 = vmatprep.subr.mxu0 0.0
        %824 = vmatpush1.msra.mxu0 0.0
        %825 = vmatprep.subr.mxu0 0.0
        %826 = vmatpush1.msra.mxu0 0.0
        %827 = vmatprep.subr.mxu0 0.0
        %828 = vmatpush1.msra.mxu0 0.0
        %829 = vmatprep.subr.mxu0 0.0
        %830 = vmatpush1.msra.mxu0 0.0
        %831 = vmatprep.subr.mxu0 0.0
        %832 = vmatpush1.msra.mxu0 0.0
        %833 = vmatprep.subr.mxu0 0.0
        %834 = vmatpush1.msra.mxu0 0.0
        %835 = vmatprep.subr.mxu0 0.0
        %836 = vmatpush1.msra.mxu0 0.0
        %837 = vmatprep.subr.mxu0 0.0
        %838 = vmatpush1.msra.mxu0 0.0
        %839 = vmatprep.subr.mxu0 0.0
        %840 = vmatpush1.msra.mxu0 0.0
        %841 = vmatprep.subr.mxu0 0.0
        %842 = vmatpush1.msra.mxu0 0.0
        %843 = vmatprep.subr.mxu0 0.0
        %844 = vmatpush1.msra.mxu0 0.0
        %845 = vmatprep.subr.mxu0 0.0
        %846 = vmatpush1.msra.mxu0 0.0
        %847 = vmatprep.subr.mxu0 0.0
        %848 = vmatpush1.msra.mxu0 0.0
        %849 = vmatprep.subr.mxu0 0.0
        %850 = vmatpush1.msra.mxu0 0.0
        %851 = vmatprep.subr.mxu0 0.0
        %852 = vmatpush1.msra.mxu0 0.0
        %853 = vmatprep.subr.mxu0 0.0
        %854 = vmatpush1.msra.mxu0 0.0
        %855 = vmatprep.subr.mxu0 0.0
        %856 = vmatpush1.msra.mxu0 0.0
        %857 = vmatprep.subr.mxu0 0.0
        %858 = vmatpush1.msra.mxu0 0.0
        %859 = vmatprep.subr.mxu0 0.0
        %860 = vmatpush1.msra.mxu0 0.0
        %861 = vmatprep.subr.mxu0 0.0
        %862 = vmatpush1.msra.mxu0 0.0
        %863 = vmatprep.subr.mxu0 0.0
        %864 = vmatpush1.msra.mxu0 0.0
        %865 = vmatprep.subr.mxu0 0.0
        %866 = vmatpush1.msra.mxu0 0.0
        %867 = vmatprep.subr.mxu0 0.0
        %868 = vmatpush1.msra.mxu0 0.0
        %869 = vmatprep.subr.mxu0 0.0
        %870 = vmatpush1.msra.mxu0 0.0
        %871 = vmatprep.subr.mxu0 0.0
        %872 = vmatpush1.msra.mxu0 0.0
        %873 = vmatprep.subr.mxu0 0.0
        %874 = vmatpush1.msra.mxu0 0.0
        %875 = vmatprep.subr.mxu0 0.0
        %876 = vmatpush1.msra.mxu0 0.0
        %877 = vmatprep.mubr.f32.mxu0 0.0
        %878 = vmatmul.mubr.f32.gmra.mrb[0].mxu0 %v649
        %v879 = vpop.f32.mrb[0].mxu0
        %v880 = vadd.f32 %v811, %v879
        %v881 = vpop.f32.mrb[0].mxu0
        %882 = vdwg.mxu0
        %vm883 = vcmask 64512
        %v885 = vsel %vm883, %v718, 0
        %v888 = vsel %vm883, %v799, 0
        %890 = vmatprep.subr.mxu0 0.0
        %891 = vmatpush1.xpose.msra.mxu0 %v888
        %892 = vmatprep.subr.mxu0 0.0
        %893 = vmatpush1.xpose.msra.mxu0 0.0
        %894 = vmatprep.subr.mxu0 0.0
        %895 = vmatpush1.xpose.msra.mxu0 0.0
        %896 = vmatprep.subr.mxu0 0.0
        %897 = vmatpush1.xpose.msra.mxu0 0.0
        %898 = vmatprep.subr.mxu0 0.0
        %899 = vmatpush1.xpose.msra.mxu0 0.0
        %900 = vmatprep.subr.mxu0 0.0
        %901 = vmatpush1.xpose.msra.mxu0 0.0
        %902 = vmatprep.subr.mxu0 0.0
        %903 = vmatpush1.xpose.msra.mxu0 0.0
        %904 = vmatprep.subr.mxu0 0.0
        %905 = vmatpush1.xpose.msra.mxu0 0.0
        %906 = vmatprep.subr.mxu0 0.0
        %907 = vmatpush1.xpose.msra.mxu0 0.0
        %908 = vmatprep.subr.mxu0 0.0
        %909 = vmatpush1.xpose.msra.mxu0 0.0
        %910 = vmatprep.subr.mxu0 0.0
        %911 = vmatpush1.xpose.msra.mxu0 0.0
        %912 = vmatprep.subr.mxu0 0.0
        %913 = vmatpush1.xpose.msra.mxu0 0.0
        %914 = vmatprep.subr.mxu0 0.0
        %915 = vmatpush1.xpose.msra.mxu0 0.0
        %916 = vmatprep.subr.mxu0 0.0
        %917 = vmatpush1.xpose.msra.mxu0 0.0
        %918 = vmatprep.subr.mxu0 0.0
        %919 = vmatpush1.xpose.msra.mxu0 0.0
        %920 = vmatprep.subr.mxu0 0.0
        %921 = vmatpush1.xpose.msra.mxu0 0.0
        %922 = vmatprep.subr.mxu0 0.0
        %923 = vmatpush1.xpose.msra.mxu0 0.0
        %924 = vmatprep.subr.mxu0 0.0
        %925 = vmatpush1.xpose.msra.mxu0 0.0
        %926 = vmatprep.subr.mxu0 0.0
        %927 = vmatpush1.xpose.msra.mxu0 0.0
        %928 = vmatprep.subr.mxu0 0.0
        %929 = vmatpush1.xpose.msra.mxu0 0.0
        %930 = vmatprep.subr.mxu0 0.0
        %931 = vmatpush1.xpose.msra.mxu0 0.0
        %932 = vmatprep.subr.mxu0 0.0
        %933 = vmatpush1.xpose.msra.mxu0 0.0
        %934 = vmatprep.subr.mxu0 0.0
        %935 = vmatpush1.xpose.msra.mxu0 0.0
        %936 = vmatprep.subr.mxu0 0.0
        %937 = vmatpush1.xpose.msra.mxu0 0.0
        %938 = vmatprep.subr.mxu0 0.0
        %939 = vmatpush1.xpose.msra.mxu0 0.0
        %940 = vmatprep.subr.mxu0 0.0
        %941 = vmatpush1.xpose.msra.mxu0 0.0
        %942 = vmatprep.subr.mxu0 0.0
        %943 = vmatpush1.xpose.msra.mxu0 0.0
        %944 = vmatprep.subr.mxu0 0.0
        %945 = vmatpush1.xpose.msra.mxu0 0.0
        %946 = vmatprep.subr.mxu0 0.0
        %947 = vmatpush1.xpose.msra.mxu0 0.0
        %948 = vmatprep.subr.mxu0 0.0
        %949 = vmatpush1.xpose.msra.mxu0 0.0
        %950 = vmatprep.subr.mxu0 0.0
        %951 = vmatpush1.xpose.msra.mxu0 0.0
        %952 = vmatprep.subr.mxu0 0.0
        %953 = vmatpush1.xpose.msra.mxu0 0.0
        %954 = vmatprep.mubr.f32.mxu0 0.0
        %955 = vmatmul.mubr.f32.gmra.mrb[0].mxu0 %v885
        %v956 = vpop.f32.mrb[0].mxu0
        %v957 = vadd.f32 0.0, %v956
        %v958 = vpop.f32.mrb[0].mxu0
        %959 = vdwg.mxu0
        %v960 = vmul.f32 %v957, 0.35355338
        %v962 = vlaneseq
        %v963 = vshrl.u32 %v962, 7
        %v964 = vsub.s32 0, %v963
        %v965 = vrot.slane %v635, %v964
        %v967 = vadd.f32 %v960, %v965
        %v968 = vsel %vm883, %v967, -inf
        %969 = vmax.xlane.f32.xlu0 %v968
        %v970 = vpop.xlane.xlu0 %969
        %v971 = vsub.f32 %v967, %v970
        %v972 = vmul.f32 %v971, 1.442695
        %v973 = vpow.pop %v972
        %v974 = vsel %vm883, %v973, 0.0
        %975 = vadd.xlane.f32.xlu0 %v974
        %v976 = vpop.xlane.xlu0 %975
        %v977 = vrcp.pop %v976
        %v978 = vmul.f32 %v973, %v977
        %v980 = vsel %vm883, %v978, 0
        %982 = vmatprep.subr.mxu0 0.0
        %983 = vmatpush1.msra.mxu0 %v880
        %984 = vmatprep.subr.mxu0 0.0
        %985 = vmatpush1.msra.mxu0 0.0
        %986 = vmatprep.subr.mxu0 0.0
        %987 = vmatpush1.msra.mxu0 0.0
        %988 = vmatprep.subr.mxu0 0.0
        %989 = vmatpush1.msra.mxu0 0.0
        %990 = vmatprep.subr.mxu0 0.0
        %991 = vmatpush1.msra.mxu0 0.0
        %992 = vmatprep.subr.mxu0 0.0
        %993 = vmatpush1.msra.mxu0 0.0
        %994 = vmatprep.subr.mxu0 0.0
        %995 = vmatpush1.msra.mxu0 0.0
        %996 = vmatprep.subr.mxu0 0.0
        %997 = vmatpush1.msra.mxu0 0.0
        %998 = vmatprep.subr.mxu0 0.0
        %999 = vmatpush1.msra.mxu0 0.0
        %1000 = vmatprep.subr.mxu0 0.0
        %1001 = vmatpush1.msra.mxu0 0.0
        %1002 = vmatprep.subr.mxu0 0.0
        %1003 = vmatpush1.msra.mxu0 0.0
        %1004 = vmatprep.subr.mxu0 0.0
        %1005 = vmatpush1.msra.mxu0 0.0
        %1006 = vmatprep.subr.mxu0 0.0
        %1007 = vmatpush1.msra.mxu0 0.0
        %1008 = vmatprep.subr.mxu0 0.0
        %1009 = vmatpush1.msra.mxu0 0.0
        %1010 = vmatprep.subr.mxu0 0.0
        %1011 = vmatpush1.msra.mxu0 0.0
        %1012 = vmatprep.subr.mxu0 0.0
        %1013 = vmatpush1.msra.mxu0 0.0
        %1014 = vmatprep.subr.mxu0 0.0
        %1015 = vmatpush1.msra.mxu0 0.0
        %1016 = vmatprep.subr.mxu0 0.0
        %1017 = vmatpush1.msra.mxu0 0.0
        %1018 = vmatprep.subr.mxu0 0.0
        %1019 = vmatpush1.msra.mxu0 0.0
        %1020 = vmatprep.subr.mxu0 0.0
        %1021 = vmatpush1.msra.mxu0 0.0
        %1022 = vmatprep.subr.mxu0 0.0
        %1023 = vmatpush1.msra.mxu0 0.0
        %1024 = vmatprep.subr.mxu0 0.0
        %1025 = vmatpush1.msra.mxu0 0.0
        %1026 = vmatprep.subr.mxu0 0.0
        %1027 = vmatpush1.msra.mxu0 0.0
        %1028 = vmatprep.subr.mxu0 0.0
        %1029 = vmatpush1.msra.mxu0 0.0
        %1030 = vmatprep.subr.mxu0 0.0
        %1031 = vmatpush1.msra.mxu0 0.0
        %1032 = vmatprep.subr.mxu0 0.0
        %1033 = vmatpush1.msra.mxu0 0.0
        %1034 = vmatprep.subr.mxu0 0.0
        %1035 = vmatpush1.msra.mxu0 0.0
        %1036 = vmatprep.subr.mxu0 0.0
        %1037 = vmatpush1.msra.mxu0 0.0
        %1038 = vmatprep.subr.mxu0 0.0
        %1039 = vmatpush1.msra.mxu0 0.0
        %1040 = vmatprep.subr.mxu0 0.0
        %1041 = vmatpush1.msra.mxu0 0.0
        %1042 = vmatprep.subr.mxu0 0.0
        %1043 = vmatpush1.msra.mxu0 0.0
        %1044 = vmatprep.subr.mxu0 0.0
        %1045 = vmatpush1.msra.mxu0 0.0
        %1046 = vmatprep.mubr.f32.mxu0 0.0
        %1047 = vmatmul.mubr.f32.gmra.mrb[0].mxu0 %v980
        %v1048 = vpop.f32.mrb[0].mxu0
        %v1049 = vadd.f32 0.0, %v1048
        %v1050 = vpop.f32.mrb[0].mxu0
        %1051 = vdwg.mxu0
        %v1052 = vld [vmem:[#allocation5] sm:$0xff]
        %1053 = vrot.lane.b32.xlu0 %v718, 120
        %v1054 = vpop.permute.xlu0 %1053
        %1055 = vrot.lane.b32.xlu0 %v799, 120
        %v1056 = vpop.permute.xlu0 %1055
        %v1057 = vsel %vm883, %v1054, 0
        %v1059 = vsel %vm883, %v1056, 0
        %1061 = vmatprep.subr.mxu0 0.0
        %1062 = vmatpush1.xpose.msra.mxu0 %v1059
        %1063 = vmatprep.subr.mxu0 0.0
        %1064 = vmatpush1.xpose.msra.mxu0 0.0
        %1065 = vmatprep.subr.mxu0 0.0
        %1066 = vmatpush1.xpose.msra.mxu0 0.0
        %1067 = vmatprep.subr.mxu0 0.0
        %1068 = vmatpush1.xpose.msra.mxu0 0.0
        %1069 = vmatprep.subr.mxu0 0.0
        %1070 = vmatpush1.xpose.msra.mxu0 0.0
        %1071 = vmatprep.subr.mxu0 0.0
        %1072 = vmatpush1.xpose.msra.mxu0 0.0
        %1073 = vmatprep.subr.mxu0 0.0
        %1074 = vmatpush1.xpose.msra.mxu0 0.0
        %1075 = vmatprep.subr.mxu0 0.0
        %1076 = vmatpush1.xpose.msra.mxu0 0.0
        %1077 = vmatprep.subr.mxu0 0.0
        %1078 = vmatpush1.xpose.msra.mxu0 0.0
        %1079 = vmatprep.subr.mxu0 0.0
        %1080 = vmatpush1.xpose.msra.mxu0 0.0
        %1081 = vmatprep.subr.mxu0 0.0
        %1082 = vmatpush1.xpose.msra.mxu0 0.0
        %1083 = vmatprep.subr.mxu0 0.0
        %1084 = vmatpush1.xpose.msra.mxu0 0.0
        %1085 = vmatprep.subr.mxu0 0.0
        %1086 = vmatpush1.xpose.msra.mxu0 0.0
        %1087 = vmatprep.subr.mxu0 0.0
        %1088 = vmatpush1.xpose.msra.mxu0 0.0
        %1089 = vmatprep.subr.mxu0 0.0
        %1090 = vmatpush1.xpose.msra.mxu0 0.0
        %1091 = vmatprep.subr.mxu0 0.0
        %1092 = vmatpush1.xpose.msra.mxu0 0.0
        %1093 = vmatprep.subr.mxu0 0.0
        %1094 = vmatpush1.xpose.msra.mxu0 0.0
        %1095 = vmatprep.subr.mxu0 0.0
        %1096 = vmatpush1.xpose.msra.mxu0 0.0
        %1097 = vmatprep.subr.mxu0 0.0
        %1098 = vmatpush1.xpose.msra.mxu0 0.0
        %1099 = vmatprep.subr.mxu0 0.0
        %1100 = vmatpush1.xpose.msra.mxu0 0.0
        %1101 = vmatprep.subr.mxu0 0.0
        %1102 = vmatpush1.xpose.msra.mxu0 0.0
        %1103 = vmatprep.subr.mxu0 0.0
        %1104 = vmatpush1.xpose.msra.mxu0 0.0
        %1105 = vmatprep.subr.mxu0 0.0
        %1106 = vmatpush1.xpose.msra.mxu0 0.0
        %1107 = vmatprep.subr.mxu0 0.0
        %1108 = vmatpush1.xpose.msra.mxu0 0.0
        %1109 = vmatprep.subr.mxu0 0.0
        %1110 = vmatpush1.xpose.msra.mxu0 0.0
        %1111 = vmatprep.subr.mxu0 0.0
        %1112 = vmatpush1.xpose.msra.mxu0 0.0
        %1113 = vmatprep.subr.mxu0 0.0
        %1114 = vmatpush1.xpose.msra.mxu0 0.0
        %1115 = vmatprep.subr.mxu0 0.0
        %1116 = vmatpush1.xpose.msra.mxu0 0.0
        %1117 = vmatprep.subr.mxu0 0.0
        %1118 = vmatpush1.xpose.msra.mxu0 0.0
        %1119 = vmatprep.subr.mxu0 0.0
        %1120 = vmatpush1.xpose.msra.mxu0 0.0
        %1121 = vmatprep.subr.mxu0 0.0
        %1122 = vmatpush1.xpose.msra.mxu0 0.0
        %1123 = vmatprep.subr.mxu0 0.0
        %1124 = vmatpush1.xpose.msra.mxu0 0.0
        %1125 = vmatprep.mubr.f32.mxu0 0.0
        %1126 = vmatmul.mubr.f32.gmra.mrb[0].mxu0 %v1057
        %v1127 = vpop.f32.mrb[0].mxu0
        %v1128 = vadd.f32 0.0, %v1127
        %v1129 = vpop.f32.mrb[0].mxu0
        %1130 = vdwg.mxu0
        %v1131 = vmul.f32 %v1128, 0.35355338
        %v1132 = vadd.f32 %v1131, %v965
        %v1133 = vsel %vm883, %v1132, -inf
        %1134 = vmax.xlane.f32.xlu0 %v1133
        %v1135 = vpop.xlane.xlu0 %1134
        %v1136 = vsub.f32 %v1132, %v1135
        %v1137 = vmul.f32 %v1136, 1.442695
        %v1138 = vpow.pop %v1137
        %v1139 = vsel %vm883, %v1138, 0.0
        %1140 = vadd.xlane.f32.xlu0 %v1139
        %v1141 = vpop.xlane.xlu0 %1140
        %v1142 = vrcp.pop %v1141
        %v1143 = vmul.f32 %v1138, %v1142
        %1145 = vrot.lane.b32.xlu0 %v880, 120
        %v1146 = vpop.permute.xlu0 %1145
        %v1149 = vsel %vm883, %v1143, 0
        %1151 = vmatprep.subr.mxu0 0.0
        %1152 = vmatpush1.msra.mxu0 %v1146
        %1153 = vmatprep.subr.mxu0 0.0
        %1154 = vmatpush1.msra.mxu0 0.0
        %1155 = vmatprep.subr.mxu0 0.0
        %1156 = vmatpush1.msra.mxu0 0.0
        %1157 = vmatprep.subr.mxu0 0.0
        %1158 = vmatpush1.msra.mxu0 0.0
        %1159 = vmatprep.subr.mxu0 0.0
        %1160 = vmatpush1.msra.mxu0 0.0
        %1161 = vmatprep.subr.mxu0 0.0
        %1162 = vmatpush1.msra.mxu0 0.0
        %1163 = vmatprep.subr.mxu0 0.0
        %1164 = vmatpush1.msra.mxu0 0.0
        %1165 = vmatprep.subr.mxu0 0.0
        %1166 = vmatpush1.msra.mxu0 0.0
        %1167 = vmatprep.subr.mxu0 0.0
        %1168 = vmatpush1.msra.mxu0 0.0
        %1169 = vmatprep.subr.mxu0 0.0
        %1170 = vmatpush1.msra.mxu0 0.0
        %1171 = vmatprep.subr.mxu0 0.0
        %1172 = vmatpush1.msra.mxu0 0.0
        %1173 = vmatprep.subr.mxu0 0.0
        %1174 = vmatpush1.msra.mxu0 0.0
        %1175 = vmatprep.subr.mxu0 0.0
        %1176 = vmatpush1.msra.mxu0 0.0
        %1177 = vmatprep.subr.mxu0 0.0
        %1178 = vmatpush1.msra.mxu0 0.0
        %1179 = vmatprep.subr.mxu0 0.0
        %1180 = vmatpush1.msra.mxu0 0.0
        %1181 = vmatprep.subr.mxu0 0.0
        %1182 = vmatpush1.msra.mxu0 0.0
        %1183 = vmatprep.subr.mxu0 0.0
        %1184 = vmatpush1.msra.mxu0 0.0
        %1185 = vmatprep.subr.mxu0 0.0
        %1186 = vmatpush1.msra.mxu0 0.0
        %1187 = vmatprep.subr.mxu0 0.0
        %1188 = vmatpush1.msra.mxu0 0.0
        %1189 = vmatprep.subr.mxu0 0.0
        %1190 = vmatpush1.msra.mxu0 0.0
        %1191 = vmatprep.subr.mxu0 0.0
        %1192 = vmatpush1.msra.mxu0 0.0
        %1193 = vmatprep.subr.mxu0 0.0
        %1194 = vmatpush1.msra.mxu0 0.0
        %1195 = vmatprep.subr.mxu0 0.0
        %1196 = vmatpush1.msra.mxu0 0.0
        %1197 = vmatprep.subr.mxu0 0.0
        %1198 = vmatpush1.msra.mxu0 0.0
        %1199 = vmatprep.subr.mxu0 0.0
        %1200 = vmatpush1.msra.mxu0 0.0
        %1201 = vmatprep.subr.mxu0 0.0
        %1202 = vmatpush1.msra.mxu0 0.0
        %1203 = vmatprep.subr.mxu0 0.0
        %1204 = vmatpush1.msra.mxu0 0.0
        %1205 = vmatprep.subr.mxu0 0.0
        %1206 = vmatpush1.msra.mxu0 0.0
        %1207 = vmatprep.subr.mxu0 0.0
        %1208 = vmatpush1.msra.mxu0 0.0
        %1209 = vmatprep.subr.mxu0 0.0
        %1210 = vmatpush1.msra.mxu0 0.0
        %1211 = vmatprep.subr.mxu0 0.0
        %1212 = vmatpush1.msra.mxu0 0.0
        %1213 = vmatprep.subr.mxu0 0.0
        %1214 = vmatpush1.msra.mxu0 0.0
        %1215 = vmatprep.mubr.f32.mxu0 0.0
        %1216 = vmatmul.mubr.f32.gmra.mrb[0].mxu0 %v1149
        %v1217 = vpop.f32.mrb[0].mxu0
        %v1218 = vadd.f32 0.0, %v1217
        %v1219 = vpop.f32.mrb[0].mxu0
        %1220 = vdwg.mxu0
        %v1221 = vld [vmem:[#allocation5 + $0x8] sm:$0xff]
        %v1223 = vsel %vm883, %v1218, 0
        %1225 = vmatprep.subr.mxu0 0.0
        %1226 = vmatpush1.msra.mxu0 %v1221
        %1227 = vmatprep.subr.mxu0 0.0
        %1228 = vmatpush1.msra.mxu0 0.0
        %1229 = vmatprep.subr.mxu0 0.0
        %1230 = vmatpush1.msra.mxu0 0.0
        %1231 = vmatprep.subr.mxu0 0.0
        %1232 = vmatpush1.msra.mxu0 0.0
        %1233 = vmatprep.subr.mxu0 0.0
        %1234 = vmatpush1.msra.mxu0 0.0
        %1235 = vmatprep.subr.mxu0 0.0
        %1236 = vmatpush1.msra.mxu0 0.0
        %1237 = vmatprep.subr.mxu0 0.0
        %1238 = vmatpush1.msra.mxu0 0.0
        %1239 = vmatprep.subr.mxu0 0.0
        %1240 = vmatpush1.msra.mxu0 0.0
        %1241 = vmatprep.subr.mxu0 0.0
        %1242 = vmatpush1.msra.mxu0 0.0
        %1243 = vmatprep.subr.mxu0 0.0
        %1244 = vmatpush1.msra.mxu0 0.0
        %1245 = vmatprep.subr.mxu0 0.0
        %1246 = vmatpush1.msra.mxu0 0.0
        %1247 = vmatprep.subr.mxu0 0.0
        %1248 = vmatpush1.msra.mxu0 0.0
        %1249 = vmatprep.subr.mxu0 0.0
        %1250 = vmatpush1.msra.mxu0 0.0
        %1251 = vmatprep.subr.mxu0 0.0
        %1252 = vmatpush1.msra.mxu0 0.0
        %1253 = vmatprep.subr.mxu0 0.0
        %1254 = vmatpush1.msra.mxu0 0.0
        %1255 = vmatprep.subr.mxu0 0.0
        %1256 = vmatpush1.msra.mxu0 0.0
        %1257 = vmatprep.subr.mxu0 0.0
        %1258 = vmatpush1.msra.mxu0 0.0
        %1259 = vmatprep.subr.mxu0 0.0
        %1260 = vmatpush1.msra.mxu0 0.0
        %1261 = vmatprep.subr.mxu0 0.0
        %1262 = vmatpush1.msra.mxu0 0.0
        %1263 = vmatprep.subr.mxu0 0.0
        %1264 = vmatpush1.msra.mxu0 0.0
        %1265 = vmatprep.subr.mxu0 0.0
        %1266 = vmatpush1.msra.mxu0 0.0
        %1267 = vmatprep.subr.mxu0 0.0
        %1268 = vmatpush1.msra.mxu0 0.0
        %1269 = vmatprep.subr.mxu0 0.0
        %1270 = vmatpush1.msra.mxu0 0.0
        %1271 = vmatprep.subr.mxu0 0.0
        %1272 = vmatpush1.msra.mxu0 0.0
        %1273 = vmatprep.subr.mxu0 0.0
        %1274 = vmatpush1.msra.mxu0 0.0
        %1275 = vmatprep.subr.mxu0 0.0
        %1276 = vmatpush1.msra.mxu0 0.0
        %1277 = vmatprep.subr.mxu0 0.0
        %1278 = vmatpush1.msra.mxu0 0.0
        %1279 = vmatprep.subr.mxu0 0.0
        %1280 = vmatpush1.msra.mxu0 0.0
        %1281 = vmatprep.subr.mxu0 0.0
        %1282 = vmatpush1.msra.mxu0 0.0
        %1283 = vmatprep.subr.mxu0 0.0
        %1284 = vmatpush1.msra.mxu0 0.0
        %1285 = vmatprep.subr.mxu0 0.0
        %1286 = vmatpush1.msra.mxu0 0.0
        %1287 = vmatprep.subr.mxu0 0.0
        %1288 = vmatpush1.msra.mxu0 0.0
        %1289 = vmatprep.mubr.f32.mxu0 0.0
        %1290 = vmatmul.mubr.f32.gmra.mrb[0].mxu0 %v1223
        %v1291 = vpop.f32.mrb[0].mxu0
        %v1292 = vadd.f32 0.0, %v1291
        %v1293 = vpop.f32.mrb[0].mxu0
        %1294 = vdwg.mxu0
        %v1296 = vsel %vm883, %v1049, 0
        %1298 = vmatprep.subr.mxu0 0.0
        %1299 = vmatpush1.msra.mxu0 %v1052
        %1300 = vmatprep.subr.mxu0 0.0
        %1301 = vmatpush1.msra.mxu0 0.0
        %1302 = vmatprep.subr.mxu0 0.0
        %1303 = vmatpush1.msra.mxu0 0.0
        %1304 = vmatprep.subr.mxu0 0.0
        %1305 = vmatpush1.msra.mxu0 0.0
        %1306 = vmatprep.subr.mxu0 0.0
        %1307 = vmatpush1.msra.mxu0 0.0
        %1308 = vmatprep.subr.mxu0 0.0
        %1309 = vmatpush1.msra.mxu0 0.0
        %1310 = vmatprep.subr.mxu0 0.0
        %1311 = vmatpush1.msra.mxu0 0.0
        %1312 = vmatprep.subr.mxu0 0.0
        %1313 = vmatpush1.msra.mxu0 0.0
        %1314 = vmatprep.subr.mxu0 0.0
        %1315 = vmatpush1.msra.mxu0 0.0
        %1316 = vmatprep.subr.mxu0 0.0
        %1317 = vmatpush1.msra.mxu0 0.0
        %1318 = vmatprep.subr.mxu0 0.0
        %1319 = vmatpush1.msra.mxu0 0.0
        %1320 = vmatprep.subr.mxu0 0.0
        %1321 = vmatpush1.msra.mxu0 0.0
        %1322 = vmatprep.subr.mxu0 0.0
        %1323 = vmatpush1.msra.mxu0 0.0
        %1324 = vmatprep.subr.mxu0 0.0
        %1325 = vmatpush1.msra.mxu0 0.0
        %1326 = vmatprep.subr.mxu0 0.0
        %1327 = vmatpush1.msra.mxu0 0.0
        %1328 = vmatprep.subr.mxu0 0.0
        %1329 = vmatpush1.msra.mxu0 0.0
        %1330 = vmatprep.subr.mxu0 0.0
        %1331 = vmatpush1.msra.mxu0 0.0
        %1332 = vmatprep.subr.mxu0 0.0
        %1333 = vmatpush1.msra.mxu0 0.0
        %1334 = vmatprep.subr.mxu0 0.0
        %1335 = vmatpush1.msra.mxu0 0.0
        %1336 = vmatprep.subr.mxu0 0.0
        %1337 = vmatpush1.msra.mxu0 0.0
        %1338 = vmatprep.subr.mxu0 0.0
        %1339 = vmatpush1.msra.mxu0 0.0
        %1340 = vmatprep.subr.mxu0 0.0
        %1341 = vmatpush1.msra.mxu0 0.0
        %1342 = vmatprep.subr.mxu0 0.0
        %1343 = vmatpush1.msra.mxu0 0.0
        %1344 = vmatprep.subr.mxu0 0.0
        %1345 = vmatpush1.msra.mxu0 0.0
        %1346 = vmatprep.subr.mxu0 0.0
        %1347 = vmatpush1.msra.mxu0 0.0
        %1348 = vmatprep.subr.mxu0 0.0
        %1349 = vmatpush1.msra.mxu0 0.0
        %1350 = vmatprep.subr.mxu0 0.0
        %1351 = vmatpush1.msra.mxu0 0.0
        %1352 = vmatprep.subr.mxu0 0.0
        %1353 = vmatpush1.msra.mxu0 0.0
        %1354 = vmatprep.subr.mxu0 0.0
        %1355 = vmatpush1.msra.mxu0 0.0
        %1356 = vmatprep.subr.mxu0 0.0
        %1357 = vmatpush1.msra.mxu0 0.0
        %1358 = vmatprep.subr.mxu0 0.0
        %1359 = vmatpush1.msra.mxu0 0.0
        %1360 = vmatprep.subr.mxu0 0.0
        %1361 = vmatpush1.msra.mxu0 0.0
        %1362 = vmatprep.mubr.f32.mxu0 0.0
        %1363 = vmatmul.mubr.f32.gmra.mrb[0].mxu0 %v1296
        %v1364 = vpop.f32.mrb[0].mxu0
        %v1365 = vadd.f32 %v1292, %v1364
        %v1366 = vpop.f32.mrb[0].mxu0
        %1367 = vdwg.mxu0
        %1368 = vrot.lane.b32.xlu0 %v718, 112
        %v1369 = vpop.permute.xlu0 %1368
        %1370 = vrot.lane.b32.xlu0 %v799, 112
        %v1371 = vpop.permute.xlu0 %1370
        %v1372 = vsel %vm883, %v1369, 0
        %v1374 = vsel %vm883, %v1371, 0
        %1376 = vmatprep.subr.mxu0 0.0
        %1377 = vmatpush1.xpose.msra.mxu0 %v1374
        %1378 = vmatprep.subr.mxu0 0.0
        %1379 = vmatpush1.xpose.msra.mxu0 0.0
        %1380 = vmatprep.subr.mxu0 0.0
        %1381 = vmatpush1.xpose.msra.mxu0 0.0
        %1382 = vmatprep.subr.mxu0 0.0
        %1383 = vmatpush1.xpose.msra.mxu0 0.0
        %1384 = vmatprep.subr.mxu0 0.0
        %1385 = vmatpush1.xpose.msra.mxu0 0.0
        %1386 = vmatprep.subr.mxu0 0.0
        %1387 = vmatpush1.xpose.msra.mxu0 0.0
        %1388 = vmatprep.subr.mxu0 0.0
        %1389 = vmatpush1.xpose.msra.mxu0 0.0
        %1390 = vmatprep.subr.mxu0 0.0
        %1391 = vmatpush1.xpose.msra.mxu0 0.0
        %1392 = vmatprep.subr.mxu0 0.0
        %1393 = vmatpush1.xpose.msra.mxu0 0.0
        %1394 = vmatprep.subr.mxu0 0.0
        %1395 = vmatpush1.xpose.msra.mxu0 0.0
        %1396 = vmatprep.subr.mxu0 0.0
        %1397 = vmatpush1.xpose.msra.mxu0 0.0
        %1398 = vmatprep.subr.mxu0 0.0
        %1399 = vmatpush1.xpose.msra.mxu0 0.0
        %1400 = vmatprep.subr.mxu0 0.0
        %1401 = vmatpush1.xpose.msra.mxu0 0.0
        %1402 = vmatprep.subr.mxu0 0.0
        %1403 = vmatpush1.xpose.msra.mxu0 0.0
        %1404 = vmatprep.subr.mxu0 0.0
        %1405 = vmatpush1.xpose.msra.mxu0 0.0
        %1406 = vmatprep.subr.mxu0 0.0
        %1407 = vmatpush1.xpose.msra.mxu0 0.0
        %1408 = vmatprep.subr.mxu0 0.0
        %1409 = vmatpush1.xpose.msra.mxu0 0.0
        %1410 = vmatprep.subr.mxu0 0.0
        %1411 = vmatpush1.xpose.msra.mxu0 0.0
        %1412 = vmatprep.subr.mxu0 0.0
        %1413 = vmatpush1.xpose.msra.mxu0 0.0
        %1414 = vmatprep.subr.mxu0 0.0
        %1415 = vmatpush1.xpose.msra.mxu0 0.0
        %1416 = vmatprep.subr.mxu0 0.0
        %1417 = vmatpush1.xpose.msra.mxu0 0.0
        %1418 = vmatprep.subr.mxu0 0.0
        %1419 = vmatpush1.xpose.msra.mxu0 0.0
        %1420 = vmatprep.subr.mxu0 0.0
        %1421 = vmatpush1.xpose.msra.mxu0 0.0
        %1422 = vmatprep.subr.mxu0 0.0
        %1423 = vmatpush1.xpose.msra.mxu0 0.0
        %1424 = vmatprep.subr.mxu0 0.0
        %1425 = vmatpush1.xpose.msra.mxu0 0.0
        %1426 = vmatprep.subr.mxu0 0.0
        %1427 = vmatpush1.xpose.msra.mxu0 0.0
        %1428 = vmatprep.subr.mxu0 0.0
        %1429 = vmatpush1.xpose.msra.mxu0 0.0
        %1430 = vmatprep.subr.mxu0 0.0
        %1431 = vmatpush1.xpose.msra.mxu0 0.0
        %1432 = vmatprep.subr.mxu0 0.0
        %1433 = vmatpush1.xpose.msra.mxu0 0.0
        %1434 = vmatprep.subr.mxu0 0.0
        %1435 = vmatpush1.xpose.msra.mxu0 0.0
        %1436 = vmatprep.subr.mxu0 0.0
        %1437 = vmatpush1.xpose.msra.mxu0 0.0
        %1438 = vmatprep.subr.mxu0 0.0
        %1439 = vmatpush1.xpose.msra.mxu0 0.0
        %1440 = vmatprep.mubr.f32.mxu0 0.0
        %1441 = vmatmul.mubr.f32.gmra.mrb[0].mxu0 %v1372
        %v1442 = vpop.f32.mrb[0].mxu0
        %v1443 = vadd.f32 0.0, %v1442
        %v1444 = vpop.f32.mrb[0].mxu0
        %1445 = vdwg.mxu0
        %v1446 = vmul.f32 %v1443, 0.35355338
        %v1447 = vadd.f32 %v1446, %v965
        %v1448 = vsel %vm883, %v1447, -inf
        %1449 = vmax.xlane.f32.xlu0 %v1448
        %v1450 = vpop.xlane.xlu0 %1449
        %v1451 = vsub.f32 %v1447, %v1450
        %v1452 = vmul.f32 %v1451, 1.442695
        %v1453 = vpow.pop %v1452
        %v1454 = vsel %vm883, %v1453, 0.0
        %1455 = vadd.xlane.f32.xlu0 %v1454
        %v1456 = vpop.xlane.xlu0 %1455
        %v1457 = vrcp.pop %v1456
        %v1458 = vmul.f32 %v1453, %v1457
        %1459 = vrot.lane.b32.xlu0 %v880, 112
        %v1460 = vpop.permute.xlu0 %1459
        %v1463 = vsel %vm883, %v1458, 0
        %1465 = vmatprep.subr.mxu0 0.0
        %1466 = vmatpush1.msra.mxu0 %v1460
        %1467 = vmatprep.subr.mxu0 0.0
        %1468 = vmatpush1.msra.mxu0 0.0
        %1469 = vmatprep.subr.mxu0 0.0
        %1470 = vmatpush1.msra.mxu0 0.0
        %1471 = vmatprep.subr.mxu0 0.0
        %1472 = vmatpush1.msra.mxu0 0.0
        %1473 = vmatprep.subr.mxu0 0.0
        %1474 = vmatpush1.msra.mxu0 0.0
        %1475 = vmatprep.subr.mxu0 0.0
        %1476 = vmatpush1.msra.mxu0 0.0
        %1477 = vmatprep.subr.mxu0 0.0
        %1478 = vmatpush1.msra.mxu0 0.0
        %1479 = vmatprep.subr.mxu0 0.0
        %1480 = vmatpush1.msra.mxu0 0.0
        %1481 = vmatprep.subr.mxu0 0.0
        %1482 = vmatpush1.msra.mxu0 0.0
        %1483 = vmatprep.subr.mxu0 0.0
        %1484 = vmatpush1.msra.mxu0 0.0
        %1485 = vmatprep.subr.mxu0 0.0
        %1486 = vmatpush1.msra.mxu0 0.0
        %1487 = vmatprep.subr.mxu0 0.0
        %1488 = vmatpush1.msra.mxu0 0.0
        %1489 = vmatprep.subr.mxu0 0.0
        %1490 = vmatpush1.msra.mxu0 0.0
        %1491 = vmatprep.subr.mxu0 0.0
        %1492 = vmatpush1.msra.mxu0 0.0
        %1493 = vmatprep.subr.mxu0 0.0
        %1494 = vmatpush1.msra.mxu0 0.0
        %1495 = vmatprep.subr.mxu0 0.0
        %1496 = vmatpush1.msra.mxu0 0.0
        %1497 = vmatprep.subr.mxu0 0.0
        %1498 = vmatpush1.msra.mxu0 0.0
        %1499 = vmatprep.subr.mxu0 0.0
        %1500 = vmatpush1.msra.mxu0 0.0
        %1501 = vmatprep.subr.mxu0 0.0
        %1502 = vmatpush1.msra.mxu0 0.0
        %1503 = vmatprep.subr.mxu0 0.0
        %1504 = vmatpush1.msra.mxu0 0.0
        %1505 = vmatprep.subr.mxu0 0.0
        %1506 = vmatpush1.msra.mxu0 0.0
        %1507 = vmatprep.subr.mxu0 0.0
        %1508 = vmatpush1.msra.mxu0 0.0
        %1509 = vmatprep.subr.mxu0 0.0
        %1510 = vmatpush1.msra.mxu0 0.0
        %1511 = vmatprep.subr.mxu0 0.0
        %1512 = vmatpush1.msra.mxu0 0.0
        %1513 = vmatprep.subr.mxu0 0.0
        %1514 = vmatpush1.msra.mxu0 0.0
        %1515 = vmatprep.subr.mxu0 0.0
        %1516 = vmatpush1.msra.mxu0 0.0
        %1517 = vmatprep.subr.mxu0 0.0
        %1518 = vmatpush1.msra.mxu0 0.0
        %1519 = vmatprep.subr.mxu0 0.0
        %1520 = vmatpush1.msra.mxu0 0.0
        %1521 = vmatprep.subr.mxu0 0.0
        %1522 = vmatpush1.msra.mxu0 0.0
        %1523 = vmatprep.subr.mxu0 0.0
        %1524 = vmatpush1.msra.mxu0 0.0
        %1525 = vmatprep.subr.mxu0 0.0
        %1526 = vmatpush1.msra.mxu0 0.0
        %1527 = vmatprep.subr.mxu0 0.0
        %1528 = vmatpush1.msra.mxu0 0.0
        %1529 = vmatprep.mubr.f32.mxu0 0.0
        %1530 = vmatmul.mubr.f32.gmra.mrb[0].mxu0 %v1463
        %v1531 = vpop.f32.mrb[0].mxu0
        %v1532 = vadd.f32 0.0, %v1531
        %v1533 = vpop.f32.mrb[0].mxu0
        %1534 = vdwg.mxu0
        %v1535 = vld [vmem:[#allocation5 + $0x10] sm:$0xff]
        %v1537 = vsel %vm883, %v1532, 0
        %1539 = vmatprep.subr.mxu0 0.0
        %1540 = vmatpush1.msra.mxu0 %v1535
        %1541 = vmatprep.subr.mxu0 0.0
        %1542 = vmatpush1.msra.mxu0 0.0
        %1543 = vmatprep.subr.mxu0 0.0
        %1544 = vmatpush1.msra.mxu0 0.0
        %1545 = vmatprep.subr.mxu0 0.0
        %1546 = vmatpush1.msra.mxu0 0.0
        %1547 = vmatprep.subr.mxu0 0.0
        %1548 = vmatpush1.msra.mxu0 0.0
        %1549 = vmatprep.subr.mxu0 0.0
        %1550 = vmatpush1.msra.mxu0 0.0
        %1551 = vmatprep.subr.mxu0 0.0
        %1552 = vmatpush1.msra.mxu0 0.0
        %1553 = vmatprep.subr.mxu0 0.0
        %1554 = vmatpush1.msra.mxu0 0.0
        %1555 = vmatprep.subr.mxu0 0.0
        %1556 = vmatpush1.msra.mxu0 0.0
        %1557 = vmatprep.subr.mxu0 0.0
        %1558 = vmatpush1.msra.mxu0 0.0
        %1559 = vmatprep.subr.mxu0 0.0
        %1560 = vmatpush1.msra.mxu0 0.0
        %1561 = vmatprep.subr.mxu0 0.0
        %1562 = vmatpush1.msra.mxu0 0.0
        %1563 = vmatprep.subr.mxu0 0.0
        %1564 = vmatpush1.msra.mxu0 0.0
        %1565 = vmatprep.subr.mxu0 0.0
        %1566 = vmatpush1.msra.mxu0 0.0
        %1567 = vmatprep.subr.mxu0 0.0
        %1568 = vmatpush1.msra.mxu0 0.0
        %1569 = vmatprep.subr.mxu0 0.0
        %1570 = vmatpush1.msra.mxu0 0.0
        %1571 = vmatprep.subr.mxu0 0.0
        %1572 = vmatpush1.msra.mxu0 0.0
        %1573 = vmatprep.subr.mxu0 0.0
        %1574 = vmatpush1.msra.mxu0 0.0
        %1575 = vmatprep.subr.mxu0 0.0
        %1576 = vmatpush1.msra.mxu0 0.0
        %1577 = vmatprep.subr.mxu0 0.0
        %1578 = vmatpush1.msra.mxu0 0.0
        %1579 = vmatprep.subr.mxu0 0.0
        %1580 = vmatpush1.msra.mxu0 0.0
        %1581 = vmatprep.subr.mxu0 0.0
        %1582 = vmatpush1.msra.mxu0 0.0
        %1583 = vmatprep.subr.mxu0 0.0
        %1584 = vmatpush1.msra.mxu0 0.0
        %1585 = vmatprep.subr.mxu0 0.0
        %1586 = vmatpush1.msra.mxu0 0.0
        %1587 = vmatprep.subr.mxu0 0.0
        %1588 = vmatpush1.msra.mxu0 0.0
        %1589 = vmatprep.subr.mxu0 0.0
        %1590 = vmatpush1.msra.mxu0 0.0
        %1591 = vmatprep.subr.mxu0 0.0
        %1592 = vmatpush1.msra.mxu0 0.0
        %1593 = vmatprep.subr.mxu0 0.0
        %1594 = vmatpush1.msra.mxu0 0.0
        %1595 = vmatprep.subr.mxu0 0.0
        %1596 = vmatpush1.msra.mxu0 0.0
        %1597 = vmatprep.subr.mxu0 0.0
        %1598 = vmatpush1.msra.mxu0 0.0
        %1599 = vmatprep.subr.mxu0 0.0
        %1600 = vmatpush1.msra.mxu0 0.0
        %1601 = vmatprep.subr.mxu0 0.0
        %1602 = vmatpush1.msra.mxu0 0.0
        %1603 = vmatprep.mubr.f32.mxu0 0.0
        %1604 = vmatmul.mubr.f32.gmra.mrb[0].mxu0 %v1537
        %v1605 = vpop.f32.mrb[0].mxu0
        %v1606 = vadd.f32 0.0, %v1605
        %v1607 = vpop.f32.mrb[0].mxu0
        %1608 = vdwg.mxu0
        %v1609 = vadd.f32 %v1365, %v1606
        %1610 = vrot.lane.b32.xlu0 %v718, 104
        %v1611 = vpop.permute.xlu0 %1610
        %1612 = vrot.lane.b32.xlu0 %v799, 104
        %v1613 = vpop.permute.xlu0 %1612
        %v1614 = vsel %vm883, %v1611, 0
        %v1616 = vsel %vm883, %v1613, 0
        %1618 = vmatprep.subr.mxu0 0.0
        %1619 = vmatpush1.xpose.msra.mxu0 %v1616
        %1620 = vmatprep.subr.mxu0 0.0
        %1621 = vmatpush1.xpose.msra.mxu0 0.0
        %1622 = vmatprep.subr.mxu0 0.0
        %1623 = vmatpush1.xpose.msra.mxu0 0.0
        %1624 = vmatprep.subr.mxu0 0.0
        %1625 = vmatpush1.xpose.msra.mxu0 0.0
        %1626 = vmatprep.subr.mxu0 0.0
        %1627 = vmatpush1.xpose.msra.mxu0 0.0
        %1628 = vmatprep.subr.mxu0 0.0
        %1629 = vmatpush1.xpose.msra.mxu0 0.0
        %1630 = vmatprep.subr.mxu0 0.0
        %1631 = vmatpush1.xpose.msra.mxu0 0.0
        %1632 = vmatprep.subr.mxu0 0.0
        %1633 = vmatpush1.xpose.msra.mxu0 0.0
        %1634 = vmatprep.subr.mxu0 0.0
        %1635 = vmatpush1.xpose.msra.mxu0 0.0
        %1636 = vmatprep.subr.mxu0 0.0
        %1637 = vmatpush1.xpose.msra.mxu0 0.0
        %1638 = vmatprep.subr.mxu0 0.0
        %1639 = vmatpush1.xpose.msra.mxu0 0.0
        %1640 = vmatprep.subr.mxu0 0.0
        %1641 = vmatpush1.xpose.msra.mxu0 0.0
        %1642 = vmatprep.subr.mxu0 0.0
        %1643 = vmatpush1.xpose.msra.mxu0 0.0
        %1644 = vmatprep.subr.mxu0 0.0
        %1645 = vmatpush1.xpose.msra.mxu0 0.0
        %1646 = vmatprep.subr.mxu0 0.0
        %1647 = vmatpush1.xpose.msra.mxu0 0.0
        %1648 = vmatprep.subr.mxu0 0.0
        %1649 = vmatpush1.xpose.msra.mxu0 0.0
        %1650 = vmatprep.subr.mxu0 0.0
        %1651 = vmatpush1.xpose.msra.mxu0 0.0
        %1652 = vmatprep.subr.mxu0 0.0
        %1653 = vmatpush1.xpose.msra.mxu0 0.0
        %1654 = vmatprep.subr.mxu0 0.0
        %1655 = vmatpush1.xpose.msra.mxu0 0.0
        %1656 = vmatprep.subr.mxu0 0.0
        %1657 = vmatpush1.xpose.msra.mxu0 0.0
        %1658 = vmatprep.subr.mxu0 0.0
        %1659 = vmatpush1.xpose.msra.mxu0 0.0
        %1660 = vmatprep.subr.mxu0 0.0
        %1661 = vmatpush1.xpose.msra.mxu0 0.0
        %1662 = vmatprep.subr.mxu0 0.0
        %1663 = vmatpush1.xpose.msra.mxu0 0.0
        %1664 = vmatprep.subr.mxu0 0.0
        %1665 = vmatpush1.xpose.msra.mxu0 0.0
        %1666 = vmatprep.subr.mxu0 0.0
        %1667 = vmatpush1.xpose.msra.mxu0 0.0
        %1668 = vmatprep.subr.mxu0 0.0
        %1669 = vmatpush1.xpose.msra.mxu0 0.0
        %1670 = vmatprep.subr.mxu0 0.0
        %1671 = vmatpush1.xpose.msra.mxu0 0.0
        %1672 = vmatprep.subr.mxu0 0.0
        %1673 = vmatpush1.xpose.msra.mxu0 0.0
        %1674 = vmatprep.subr.mxu0 0.0
        %1675 = vmatpush1.xpose.msra.mxu0 0.0
        %1676 = vmatprep.subr.mxu0 0.0
        %1677 = vmatpush1.xpose.msra.mxu0 0.0
        %1678 = vmatprep.subr.mxu0 0.0
        %1679 = vmatpush1.xpose.msra.mxu0 0.0
        %1680 = vmatprep.subr.mxu0 0.0
        %1681 = vmatpush1.xpose.msra.mxu0 0.0
        %1682 = vmatprep.mubr.f32.mxu0 0.0
        %1683 = vmatmul.mubr.f32.gmra.mrb[0].mxu0 %v1614
        %v1684 = vpop.f32.mrb[0].mxu0
        %v1685 = vadd.f32 0.0, %v1684
        %v1686 = vpop.f32.mrb[0].mxu0
        %1687 = vdwg.mxu0
        %v1688 = vmul.f32 %v1685, 0.35355338
        %v1689 = vadd.f32 %v1688, %v965
        %v1690 = vsel %vm883, %v1689, -inf
        %1691 = vmax.xlane.f32.xlu0 %v1690
        %v1692 = vpop.xlane.xlu0 %1691
        %v1693 = vsub.f32 %v1689, %v1692
        %v1694 = vmul.f32 %v1693, 1.442695
        %v1695 = vpow.pop %v1694
        %v1696 = vsel %vm883, %v1695, 0.0
        %1697 = vadd.xlane.f32.xlu0 %v1696
        %v1698 = vpop.xlane.xlu0 %1697
        %v1699 = vrcp.pop %v1698
        %v1700 = vmul.f32 %v1695, %v1699
        %1701 = vrot.lane.b32.xlu0 %v880, 104
        %v1702 = vpop.permute.xlu0 %1701
        %v1705 = vsel %vm883, %v1700, 0
        %1707 = vmatprep.subr.mxu0 0.0
        %1708 = vmatpush1.msra.mxu0 %v1702
        %1709 = vmatprep.subr.mxu0 0.0
        %1710 = vmatpush1.msra.mxu0 0.0
        %1711 = vmatprep.subr.mxu0 0.0
        %1712 = vmatpush1.msra.mxu0 0.0
        %1713 = vmatprep.subr.mxu0 0.0
        %1714 = vmatpush1.msra.mxu0 0.0
        %1715 = vmatprep.subr.mxu0 0.0
        %1716 = vmatpush1.msra.mxu0 0.0
        %1717 = vmatprep.subr.mxu0 0.0
        %1718 = vmatpush1.msra.mxu0 0.0
        %1719 = vmatprep.subr.mxu0 0.0
        %1720 = vmatpush1.msra.mxu0 0.0
        %1721 = vmatprep.subr.mxu0 0.0
        %1722 = vmatpush1.msra.mxu0 0.0
        %1723 = vmatprep.subr.mxu0 0.0
        %1724 = vmatpush1.msra.mxu0 0.0
        %1725 = vmatprep.subr.mxu0 0.0
        %1726 = vmatpush1.msra.mxu0 0.0
        %1727 = vmatprep.subr.mxu0 0.0
        %1728 = vmatpush1.msra.mxu0 0.0
        %1729 = vmatprep.subr.mxu0 0.0
        %1730 = vmatpush1.msra.mxu0 0.0
        %1731 = vmatprep.subr.mxu0 0.0
        %1732 = vmatpush1.msra.mxu0 0.0
        %1733 = vmatprep.subr.mxu0 0.0
        %1734 = vmatpush1.msra.mxu0 0.0
        %1735 = vmatprep.subr.mxu0 0.0
        %1736 = vmatpush1.msra.mxu0 0.0
        %1737 = vmatprep.subr.mxu0 0.0
        %1738 = vmatpush1.msra.mxu0 0.0
        %1739 = vmatprep.subr.mxu0 0.0
        %1740 = vmatpush1.msra.mxu0 0.0
        %1741 = vmatprep.subr.mxu0 0.0
        %1742 = vmatpush1.msra.mxu0 0.0
        %1743 = vmatprep.subr.mxu0 0.0
        %1744 = vmatpush1.msra.mxu0 0.0
        %1745 = vmatprep.subr.mxu0 0.0
        %1746 = vmatpush1.msra.mxu0 0.0
        %1747 = vmatprep.subr.mxu0 0.0
        %1748 = vmatpush1.msra.mxu0 0.0
        %1749 = vmatprep.subr.mxu0 0.0
        %1750 = vmatpush1.msra.mxu0 0.0
        %1751 = vmatprep.subr.mxu0 0.0
        %1752 = vmatpush1.msra.mxu0 0.0
        %1753 = vmatprep.subr.mxu0 0.0
        %1754 = vmatpush1.msra.mxu0 0.0
        %1755 = vmatprep.subr.mxu0 0.0
        %1756 = vmatpush1.msra.mxu0 0.0
        %1757 = vmatprep.subr.mxu0 0.0
        %1758 = vmatpush1.msra.mxu0 0.0
        %1759 = vmatprep.subr.mxu0 0.0
        %1760 = vmatpush1.msra.mxu0 0.0
        %1761 = vmatprep.subr.mxu0 0.0
        %1762 = vmatpush1.msra.mxu0 0.0
        %1763 = vmatprep.subr.mxu0 0.0
        %1764 = vmatpush1.msra.mxu0 0.0
        %1765 = vmatprep.subr.mxu0 0.0
        %1766 = vmatpush1.msra.mxu0 0.0
        %1767 = vmatprep.subr.mxu0 0.0
        %1768 = vmatpush1.msra.mxu0 0.0
        %1769 = vmatprep.subr.mxu0 0.0
        %1770 = vmatpush1.msra.mxu0 0.0
        %1771 = vmatprep.mubr.f32.mxu0 0.0
        %1772 = vmatmul.mubr.f32.gmra.mrb[0].mxu0 %v1705
        %v1773 = vpop.f32.mrb[0].mxu0
        %v1774 = vadd.f32 0.0, %v1773
        %v1775 = vpop.f32.mrb[0].mxu0
        %1776 = vdwg.mxu0
        %v1777 = vld [vmem:[#allocation5 + $0x18] sm:$0xff]
        %v1779 = vsel %vm883, %v1774, 0
        %1781 = vmatprep.subr.mxu0 0.0
        %1782 = vmatpush1.msra.mxu0 %v1777
        %1783 = vmatprep.subr.mxu0 0.0
        %1784 = vmatpush1.msra.mxu0 0.0
        %1785 = vmatprep.subr.mxu0 0.0
        %1786 = vmatpush1.msra.mxu0 0.0
        %1787 = vmatprep.subr.mxu0 0.0
        %1788 = vmatpush1.msra.mxu0 0.0
        %1789 = vmatprep.subr.mxu0 0.0
        %1790 = vmatpush1.msra.mxu0 0.0
        %1791 = vmatprep.subr.mxu0 0.0
        %1792 = vmatpush1.msra.mxu0 0.0
        %1793 = vmatprep.subr.mxu0 0.0
        %1794 = vmatpush1.msra.mxu0 0.0
        %1795 = vmatprep.subr.mxu0 0.0
        %1796 = vmatpush1.msra.mxu0 0.0
        %1797 = vmatprep.subr.mxu0 0.0
        %1798 = vmatpush1.msra.mxu0 0.0
        %1799 = vmatprep.subr.mxu0 0.0
        %1800 = vmatpush1.msra.mxu0 0.0
        %1801 = vmatprep.subr.mxu0 0.0
        %1802 = vmatpush1.msra.mxu0 0.0
        %1803 = vmatprep.subr.mxu0 0.0
        %1804 = vmatpush1.msra.mxu0 0.0
        %1805 = vmatprep.subr.mxu0 0.0
        %1806 = vmatpush1.msra.mxu0 0.0
        %1807 = vmatprep.subr.mxu0 0.0
        %1808 = vmatpush1.msra.mxu0 0.0
        %1809 = vmatprep.subr.mxu0 0.0
        %1810 = vmatpush1.msra.mxu0 0.0
        %1811 = vmatprep.subr.mxu0 0.0
        %1812 = vmatpush1.msra.mxu0 0.0
        %1813 = vmatprep.subr.mxu0 0.0
        %1814 = vmatpush1.msra.mxu0 0.0
        %1815 = vmatprep.subr.mxu0 0.0
        %1816 = vmatpush1.msra.mxu0 0.0
        %1817 = vmatprep.subr.mxu0 0.0
        %1818 = vmatpush1.msra.mxu0 0.0
        %1819 = vmatprep.subr.mxu0 0.0
        %1820 = vmatpush1.msra.mxu0 0.0
        %1821 = vmatprep.subr.mxu0 0.0
        %1822 = vmatpush1.msra.mxu0 0.0
        %1823 = vmatprep.subr.mxu0 0.0
        %1824 = vmatpush1.msra.mxu0 0.0
        %1825 = vmatprep.subr.mxu0 0.0
        %1826 = vmatpush1.msra.mxu0 0.0
        %1827 = vmatprep.subr.mxu0 0.0
        %1828 = vmatpush1.msra.mxu0 0.0
        %1829 = vmatprep.subr.mxu0 0.0
        %1830 = vmatpush1.msra.mxu0 0.0
        %1831 = vmatprep.subr.mxu0 0.0
        %1832 = vmatpush1.msra.mxu0 0.0
        %1833 = vmatprep.subr.mxu0 0.0
        %1834 = vmatpush1.msra.mxu0 0.0
        %1835 = vmatprep.subr.mxu0 0.0
        %1836 = vmatpush1.msra.mxu0 0.0
        %1837 = vmatprep.subr.mxu0 0.0
        %1838 = vmatpush1.msra.mxu0 0.0
        %1839 = vmatprep.subr.mxu0 0.0
        %1840 = vmatpush1.msra.mxu0 0.0
        %1841 = vmatprep.subr.mxu0 0.0
        %1842 = vmatpush1.msra.mxu0 0.0
        %1843 = vmatprep.subr.mxu0 0.0
        %1844 = vmatpush1.msra.mxu0 0.0
        %1845 = vmatprep.mubr.f32.mxu0 0.0
        %1846 = vmatmul.mubr.f32.gmra.mrb[0].mxu0 %v1779
        %v1847 = vpop.f32.mrb[0].mxu0
        %v1848 = vadd.f32 0.0, %v1847
        %v1849 = vpop.f32.mrb[0].mxu0
        %1850 = vdwg.mxu0
        %v1851 = vadd.f32 %v1609, %v1848
        %v1852 = vld [vmem:[%s9] sm:$0x1]
        %v1854 = vlaneseq
        %v1855 = vshrl.u32 %v1854, 7
        %v1856 = vsub.s32 0, %v1855
        %v1857 = vrot.slane %v1852, %v1856
        %v1859 = vadd.f32 %v1851, %v1857
        %v1860 = vadd.f32 %v1859, %v634
        %v1861 = vld [vmem:[%s10] sm:$0x1]
        %v1862 = vld [vmem:[%s11] sm:$0x1]
        %v1863 = vsel %vm647, %v1860, 0.0
        %1864 = vadd.xlane.f32.xlu0 %v1863
        %v1865 = vpop.xlane.xlu0 %1864
        %v1866 = vrcp.pop 32.0
        %v1867 = vmul.f32 %v1865, %v1866
        %v1868 = vsub.f32 %v1860, %v1867
        %v1869 = vmul.f32 %v1868, %v1868
        %v1870 = vsel %vm647, %v1869, 0.0
        %1871 = vadd.xlane.f32.xlu0 %v1870
        %v1872 = vpop.xlane.xlu0 %1871
        %v1873 = vmul.f32 %v1872, %v1866
        %v1874 = vadd.f32 %v1873, 1e-12
        %v1875 = vrsqrt.pop %v1874
        %v1876 = vmul.f32 %v1868, %v1875
        %v1878 = vlaneseq
        %v1879 = vshrl.u32 %v1878, 7
        %v1880 = vsub.s32 0, %v1879
        %v1881 = vrot.slane %v1861, %v1880
        %v1883 = vmul.f32 %v1876, %v1881
        %v1885 = vlaneseq
        %v1886 = vshrl.u32 %v1885, 7
        %v1887 = vsub.s32 0, %v1886
        %v1888 = vrot.slane %v1862, %v1887
        %v1890 = vadd.f32 %v1883, %v1888
        %v1891 = vld [vmem:[#allocation7] sm:$0xff]
        %v1892 = vld [vmem:[#allocation7 + $0x8] sm:$0xff]
        %v1893 = vld [vmem:[#allocation7 + $0x10] sm:$0xff]
        %v1894 = vld [vmem:[#allocation7 + $0x18] sm:$0xff]
        %v1895 = vld [vmem:[%s13] sm:$0x1]
        %v1897 = vlaneseq
        %v1898 = vshrl.u32 %v1897, 7
        %v1899 = vsub.s32 0, %v1898
        %v1900 = vrot.slane %v1895, %v1899
        %v1903 = vsel %vm647, %v1890, 0
        %1905 = vmatprep.subr.mxu0 0.0
        %1906 = vmatpush1.msra.mxu0 %v1891
        %1907 = vmatprep.subr.mxu0 0.0
        %1908 = vmatpush1.msra.mxu0 %v1892
        %1909 = vmatprep.subr.mxu0 0.0
        %1910 = vmatpush1.msra.mxu0 %v1893
        %1911 = vmatprep.subr.mxu0 0.0
        %1912 = vmatpush1.msra.mxu0 %v1894
        %1913 = vmatprep.subr.mxu0 0.0
        %1914 = vmatpush1.msra.mxu0 0.0
        %1915 = vmatprep.subr.mxu0 0.0
        %1916 = vmatpush1.msra.mxu0 0.0
        %1917 = vmatprep.subr.mxu0 0.0
        %1918 = vmatpush1.msra.mxu0 0.0
        %1919 = vmatprep.subr.mxu0 0.0
        %1920 = vmatpush1.msra.mxu0 0.0
        %1921 = vmatprep.subr.mxu0 0.0
        %1922 = vmatpush1.msra.mxu0 0.0
        %1923 = vmatprep.subr.mxu0 0.0
        %1924 = vmatpush1.msra.mxu0 0.0
        %1925 = vmatprep.subr.mxu0 0.0
        %1926 = vmatpush1.msra.mxu0 0.0
        %1927 = vmatprep.subr.mxu0 0.0
        %1928 = vmatpush1.msra.mxu0 0.0
        %1929 = vmatprep.subr.mxu0 0.0
        %1930 = vmatpush1.msra.mxu0 0.0
        %1931 = vmatprep.subr.mxu0 0.0
        %1932 = vmatpush1.msra.mxu0 0.0
        %1933 = vmatprep.subr.mxu0 0.0
        %1934 = vmatpush1.msra.mxu0 0.0
        %1935 = vmatprep.subr.mxu0 0.0
        %1936 = vmatpush1.msra.mxu0 0.0
        %1937 = vmatprep.subr.mxu0 0.0
        %1938 = vmatpush1.msra.mxu0 0.0
        %1939 = vmatprep.subr.mxu0 0.0
        %1940 = vmatpush1.msra.mxu0 0.0
        %1941 = vmatprep.subr.mxu0 0.0
        %1942 = vmatpush1.msra.mxu0 0.0
        %1943 = vmatprep.subr.mxu0 0.0
        %1944 = vmatpush1.msra.mxu0 0.0
        %1945 = vmatprep.subr.mxu0 0.0
        %1946 = vmatpush1.msra.mxu0 0.0
        %1947 = vmatprep.subr.mxu0 0.0
        %1948 = vmatpush1.msra.mxu0 0.0
        %1949 = vmatprep.subr.mxu0 0.0
        %1950 = vmatpush1.msra.mxu0 0.0
        %1951 = vmatprep.subr.mxu0 0.0
        %1952 = vmatpush1.msra.mxu0 0.0
        %1953 = vmatprep.subr.mxu0 0.0
        %1954 = vmatpush1.msra.mxu0 0.0
        %1955 = vmatprep.subr.mxu0 0.0
        %1956 = vmatpush1.msra.mxu0 0.0
        %1957 = vmatprep.subr.mxu0 0.0
        %1958 = vmatpush1.msra.mxu0 0.0
        %1959 = vmatprep.subr.mxu0 0.0
        %1960 = vmatpush1.msra.mxu0 0.0
        %1961 = vmatprep.subr.mxu0 0.0
        %1962 = vmatpush1.msra.mxu0 0.0
        %1963 = vmatprep.subr.mxu0 0.0
        %1964 = vmatpush1.msra.mxu0 0.0
        %1965 = vmatprep.subr.mxu0 0.0
        %1966 = vmatpush1.msra.mxu0 0.0
        %1967 = vmatprep.subr.mxu0 0.0
        %1968 = vmatpush1.msra.mxu0 0.0
        %1969 = vmatprep.mubr.f32.mxu0 0.0
        %1970 = vmatmul.mubr.f32.gmra.mrb[0].mxu0 %v1903
        %v1971 = vpop.f32.mrb[0].mxu0
        %v1972 = vadd.f32 %v1900, %v1971
        %v1973 = vpop.f32.mrb[0].mxu0
        %1974 = vdwg.mxu0
        %v1975 = vmul.f32 %v1972, 0.5
        %v1976 = vmul.f32 %v1972, 0.044715
        %v1977 = vmul.f32 %v1976, %v1972
        %v1978 = vmul.f32 %v1977, %v1972
        %v1979 = vadd.f32 %v1972, %v1978
        %v1980 = vmul.f32 %v1979, 0.7978846
        %v1981 = vtanh.pop %v1980
        %v1982 = vadd.f32 %v1981, 1.0
        %v1983 = vmul.f32 %v1975, %v1982
        %v1984 = vld [vmem:[%s14] sm:$0xff]
        %v1985 = vld [vmem:[%s14 + $0x8] sm:$0xff]
        %v1986 = vld [vmem:[%s14 + $0x10] sm:$0xff]
        %v1987 = vld [vmem:[%s14 + $0x18] sm:$0xff]
        %v1988 = vld [vmem:[%s14 + $0x20] sm:$0xff]
        %v1989 = vld [vmem:[%s14 + $0x28] sm:$0xff]
        %v1990 = vld [vmem:[%s14 + $0x30] sm:$0xff]
        %v1991 = vld [vmem:[%s14 + $0x38] sm:$0xff]
        %v1992 = vld [vmem:[%s15] sm:$0x1]
        %v1994 = vlaneseq
        %v1995 = vshrl.u32 %v1994, 7
        %v1996 = vsub.s32 0, %v1995
        %v1997 = vrot.slane %v1992, %v1996
        %vm1999 = vcmask 523264
        %v2001 = vsel %vm1999, %v1983, 0
        %2003 = vmatprep.subr.mxu0 0.0
        %2004 = vmatpush1.msra.mxu0 %v1984
        %2005 = vmatprep.subr.mxu0 0.0
        %2006 = vmatpush1.msra.mxu0 %v1985
        %2007 = vmatprep.subr.mxu0 0.0
        %2008 = vmatpush1.msra.mxu0 %v1986
        %2009 = vmatprep.subr.mxu0 0.0
        %2010 = vmatpush1.msra.mxu0 %v1987
        %2011 = vmatprep.subr.mxu0 0.0
        %2012 = vmatpush1.msra.mxu0 %v1988
        %2013 = vmatprep.subr.mxu0 0.0
        %2014 = vmatpush1.msra.mxu0 %v1989
        %2015 = vmatprep.subr.mxu0 0.0
        %2016 = vmatpush1.msra.mxu0 %v1990
        %2017 = vmatprep.subr.mxu0 0.0
        %2018 = vmatpush1.msra.mxu0 %v1991
        %2019 = vmatprep.subr.mxu0 0.0
        %2020 = vmatpush1.msra.mxu0 0.0
        %2021 = vmatprep.subr.mxu0 0.0
        %2022 = vmatpush1.msra.mxu0 0.0
        %2023 = vmatprep.subr.mxu0 0.0
        %2024 = vmatpush1.msra.mxu0 0.0
        %2025 = vmatprep.subr.mxu0 0.0
        %2026 = vmatpush1.msra.mxu0 0.0
        %2027 = vmatprep.subr.mxu0 0.0
        %2028 = vmatpush1.msra.mxu0 0.0
        %2029 = vmatprep.subr.mxu0 0.0
        %2030 = vmatpush1.msra.mxu0 0.0
        %2031 = vmatprep.subr.mxu0 0.0
        %2032 = vmatpush1.msra.mxu0 0.0
        %2033 = vmatprep.subr.mxu0 0.0
        %2034 = vmatpush1.msra.mxu0 0.0
        %2035 = vmatprep.subr.mxu0 0.0
        %2036 = vmatpush1.msra.mxu0 0.0
        %2037 = vmatprep.subr.mxu0 0.0
        %2038 = vmatpush1.msra.mxu0 0.0
        %2039 = vmatprep.subr.mxu0 0.0
        %2040 = vmatpush1.msra.mxu0 0.0
        %2041 = vmatprep.subr.mxu0 0.0
        %2042 = vmatpush1.msra.mxu0 0.0
        %2043 = vmatprep.subr.mxu0 0.0
        %2044 = vmatpush1.msra.mxu0 0.0
        %2045 = vmatprep.subr.mxu0 0.0
        %2046 = vmatpush1.msra.mxu0 0.0
        %2047 = vmatprep.subr.mxu0 0.0
        %2048 = vmatpush1.msra.mxu0 0.0
        %2049 = vmatprep.subr.mxu0 0.0
        %2050 = vmatpush1.msra.mxu0 0.0
        %2051 = vmatprep.subr.mxu0 0.0
        %2052 = vmatpush1.msra.mxu0 0.0
        %2053 = vmatprep.subr.mxu0 0.0
        %2054 = vmatpush1.msra.mxu0 0.0
        %2055 = vmatprep.subr.mxu0 0.0
        %2056 = vmatpush1.msra.mxu0 0.0
        %2057 = vmatprep.subr.mxu0 0.0
        %2058 = vmatpush1.msra.mxu0 0.0
        %2059 = vmatprep.subr.mxu0 0.0
        %2060 = vmatpush1.msra.mxu0 0.0
        %2061 = vmatprep.subr.mxu0 0.0
        %2062 = vmatpush1.msra.mxu0 0.0
        %2063 = vmatprep.subr.mxu0 0.0
        %2064 = vmatpush1.msra.mxu0 0.0
        %2065 = vmatprep.subr.mxu0 0.0
        %2066 = vmatpush1.msra.mxu0 0.0
        %2067 = vmatprep.mubr.f32.mxu0 0.0
        %2068 = vmatmul.mubr.f32.gmra.mrb[0].mxu0 %v2001
        %v2069 = vpop.f32.mrb[0].mxu0
        %v2070 = vadd.f32 %v1997, %v2069
        %v2071 = vpop.f32.mrb[0].mxu0
        %2072 = vdwg.mxu0
        %v2073 = vadd.f32 %v2070, %v1890
        %v2074 = vld [vmem:[%s16] sm:$0x1]
        %v2075 = vld [vmem:[%s17] sm:$0x1]
        %v2076 = vsel %vm647, %v2073, 0.0
        %2077 = vadd.xlane.f32.xlu0 %v2076
        %v2078 = vpop.xlane.xlu0 %2077
        %v2079 = vmul.f32 %v2078, %v1866
        %v2080 = vsub.f32 %v2073, %v2079
        %v2081 = vmul.f32 %v2080, %v2080
        %v2082 = vsel %vm647, %v2081, 0.0
        %2083 = vadd.xlane.f32.xlu0 %v2082
        %v2084 = vpop.xlane.xlu0 %2083
        %v2085 = vmul.f32 %v2084, %v1866
        %v2086 = vadd.f32 %v2085, 1e-12
        %v2087 = vrsqrt.pop %v2086
        %v2088 = vmul.f32 %v2080, %v2087
        %v2090 = vlaneseq
        %v2091 = vshrl.u32 %v2090, 7
        %v2092 = vsub.s32 0, %v2091
        %v2093 = vrot.slane %v2074, %v2092
        %v2095 = vmul.f32 %v2088, %v2093
        %v2097 = vlaneseq
        %v2098 = vshrl.u32 %v2097, 7
        %v2099 = vsub.s32 0, %v2098
        %v2100 = vrot.slane %v2075, %v2099
        %v2102 = vadd.f32 %v2095, %v2100
        %2103 = vst.msk [vmem:[%s630] sm:$0xff] %vm647, %v2102
        %s2104 = sand.u32 %s432, 1
        %s2105 = scalar_lea.sflag [#allocation4], %s2104
        %s2106 = sand.u32 %s432, 1
        %s2107 = smul.addr %s2106, 8
        %s2108 = scalar_lea.vmem [#allocation8], %s2107
        // Predicated region
        $region105: #{tpu_custom_call.1} parent=91 // pred_check
          %p2109 = pneg %p442
        $region106: #{tpu_custom_call.1} parent=91 // pred_check_branch
          %2111 = sbr.rel (%p2109) target = $region108
        $region107: #{tpu_custom_call.1} parent=91 // pred_region
          %s2113 = ssub.s32 128, 128
          %2114 = vsyncadd %s2105, %s2113
          %s2115 = smul.addr %s36, 128
          %s2116 = scalar_lea.hbm %s18, %s2115
          %s2118 = sshll.u32 %s2108, 4
          %s2119 = int_to_ptr.vmem [resolvable:$true] %s2118
          %2121 = dma.vmem_to_hbm [thread:$0]  %s2119, 128, %s2116, %s2105
        $region108: #{tpu_custom_call.1} parent=91 // pred_fallthru
          _
      $region92: #{tpu_custom_call.1} parent=5 // pred_fallthru
        _
      %p2122 = scmp.le.s32.totalorder 2, %s31
      // Predicated region
      $region109: #{tpu_custom_call.1} parent=5 // pred_check
        %p2123 = pneg %p2122
      $region110: #{tpu_custom_call.1} parent=5 // pred_check_branch
        %2125 = sbr.rel (%p2123) target = $region112
      $region111: #{tpu_custom_call.1} parent=5 // pred_region
        %s2126 = ssub.s32 %s31, 2
        // Predicated region
        $region113: #{tpu_custom_call.1} parent=111 // pred_check
          %p2127 = pneg %p448
        $region114: #{tpu_custom_call.1} parent=111 // pred_check_branch
          %2129 = sbr.rel (%p2127) target = $region116
        $region115: #{tpu_custom_call.1} parent=111 // pred_region
          %s2130 = sand.u32 %s433, 1
          %s2131 = scalar_lea.sflag [#allocation4], %s2130
          %s2132 = sand.u32 %s433, 1
          %s2133 = smul.addr %s2132, 8
          %s2134 = scalar_lea.vmem [#allocation8], %s2133
          %2135 = dma.done %s2131, 128
        $region116: #{tpu_custom_call.1} parent=111 // pred_fallthru
          _
      $region112: #{tpu_custom_call.1} parent=5 // pred_fallthru
        _
    $region6: #{tpu_custom_call.1} parent=1 // loop_footer
      %s35 = sadd.s32 1, %s31
    $region7: #{tpu_custom_call.1} parent=1 // loop_footer_branch
      %30 = sbr.rel target = $region3
    $region8: #{tpu_custom_call.1} parent=1 // loop_exit
      _
    %2136 = vsyncpa [#allocation3], 1
    %s2137 = scalar_lea.sflag [#allocation3], 1
    %2138 = vsyncpa %s2137, 1
    %2139 = vsyncpa [#allocation6], 1
    %2140 = vsyncpa [#allocation4], 1
    %s2141 = scalar_lea.sflag [#allocation4], 1
    %2142 = vsyncpa %s2141, 1

</llo_original>
